<compile_context>
chip_gen: v7x
topology: tpu7x:2x2x1
jax: 0.10.0
libtpu: 0.0.40
codegen_flags: <defaults>
</compile_context>

<pallas_src>
import functools

import jax
import jax.numpy as jnp
from jax.experimental import pallas as pl
from jax.experimental.pallas import tpu as pltpu


def _convlstm_kernel(w_ref, b_ref, p_ref, c_ref, wci_ref, wcf_ref, wco_ref,
                     ch_ref, cc_ref, *, Ch):
    # Single fused im2col matmul for all 4 gates of both convolutions:
    #   (4*Ch, Kc) @ (Kc, MT) -> (4*Ch, MT), bf16 operands, f32 accumulate.
    acc = jnp.dot(w_ref[...], p_ref[...], preferred_element_type=jnp.float32)
    acc = acc + b_ref[...]               # (4*Ch, 1) f32 bias, lane-broadcast

    c = c_ref[...]                       # (Ch, MT), lane-dense
    gi = acc[0 * Ch:1 * Ch, :]           # sublane-aligned slices (Ch % 8 == 0)
    gf = acc[1 * Ch:2 * Ch, :]
    gc = acc[2 * Ch:3 * Ch, :]
    go = acc[3 * Ch:4 * Ch, :]

    ci = jax.nn.sigmoid(gi + c * wci_ref[...])
    cf = jax.nn.sigmoid(gf + c * wcf_ref[...])
    cc = cf * c + ci * jnp.tanh(gc)
    co = jax.nn.sigmoid(go + cc * wco_ref[...])

    ch_ref[...] = co * jnp.tanh(cc)
    cc_ref[...] = cc


def conv_lstm_cell(x, h, c, wx, wh, b, wci, wcf, wco, *, kernel_size):
    """One ConvLSTMCell step.

    x: (B,H,W,Cin), h/c: (B,H,W,Ch) NHWC; wx: (K,K,Cin,4*Ch), wh: (K,K,Ch,4*Ch)
    HWIO with gates stacked [i,f,c,o]; b: (4*Ch,); wci/wcf/wco: (1,H,W,Ch).
    Returns (ch, cc), both (B,H,W,Ch).
    """
    B, H, W, Cin = x.shape
    Ch = h.shape[-1]
    K = kernel_size
    # TODO(synk): padding (K-1)//2 matches PyTorch 'same' behavior only for odd K.
    assert K % 2 == 1, "kernel_size must be odd (same as the PyTorch module)"
    p = (K - 1) // 2
    M = B * H * W
    Kc = K * K * (Cin + Ch)

    # ---------------- XLA glue: im2col + channels-major relayout ------------
    xp = jnp.pad(x, ((0, 0), (p, p), (p, p), (0, 0)))
    hp = jnp.pad(h, ((0, 0), (p, p), (p, p), (0, 0)))
    x_taps = jnp.stack([xp[:, dy:dy + H, dx:dx + W, :]
                        for dy in range(K) for dx in range(K)], axis=3)
    h_taps = jnp.stack([hp[:, dy:dy + H, dx:dx + W, :]
                        for dy in range(K) for dx in range(K)], axis=3)
    cols = jnp.concatenate(
        [x_taps.reshape(B, H, W, K * K * Cin),
         h_taps.reshape(B, H, W, K * K * Ch)], axis=-1)          # (B,H,W,Kc)
    patches = cols.reshape(M, Kc).T.astype(jnp.bfloat16)          # (Kc, M)

    w_fused = jnp.concatenate(
        [wx.reshape(K * K * Cin, 4 * Ch),
         wh.reshape(K * K * Ch, 4 * Ch)], axis=0).T.astype(jnp.bfloat16)  # (4Ch,Kc)
    b2 = b.reshape(4 * Ch, 1).astype(jnp.float32)

    def to_cm(a):  # (B,H,W,Ch) -> (Ch, B*H*W)
        return jnp.transpose(a, (3, 0, 1, 2)).reshape(Ch, -1)

    c_t = to_cm(c)
    wci_t = to_cm(jnp.broadcast_to(wci, (B, H, W, Ch)))
    wcf_t = to_cm(jnp.broadcast_to(wcf, (B, H, W, Ch)))
    wco_t = to_cm(jnp.broadcast_to(wco, (B, H, W, Ch)))

    # ---------------- Pallas call -------------------------------------------
    # 2 parallel tiles of the pixel axis when it splits into 128-multiples
    # (uses both v7x TensorCores); otherwise one full-M tile.
    n_tiles = 2 if (M % 256 == 0 and M >= 512) else 1
    MT = M // n_tiles

    kernel = functools.partial(_convlstm_kernel, Ch=Ch)

    grid_spec = pltpu.PrefetchScalarGridSpec(
        num_scalar_prefetch=0,
        grid=(n_tiles,),
        in_specs=[
            pl.BlockSpec((4 * Ch, Kc), lambda i: (0, 0)),   # fused weights (resident)
            pl.BlockSpec((4 * Ch, 1), lambda i: (0, 0)),    # bias (resident)
            pl.BlockSpec((Kc, MT), lambda i: (0, i)),       # im2col patches
            pl.BlockSpec((Ch, MT), lambda i: (0, i)),       # c
            pl.BlockSpec((Ch, MT), lambda i: (0, i)),       # Wci
            pl.BlockSpec((Ch, MT), lambda i: (0, i)),       # Wcf
            pl.BlockSpec((Ch, MT), lambda i: (0, i)),       # Wco
        ],
        out_specs=(
            pl.BlockSpec((Ch, MT), lambda i: (0, i)),       # ch
            pl.BlockSpec((Ch, MT), lambda i: (0, i)),       # cc
        ),
    )

    ch_t, cc_t = pl.pallas_call(
        kernel,
        out_shape=(jax.ShapeDtypeStruct((Ch, M), jnp.float32),
                   jax.ShapeDtypeStruct((Ch, M), jnp.float32)),
        grid_spec=grid_spec,
        compiler_params=pltpu.CompilerParams(
            dimension_semantics=("parallel",)),
    )(w_fused, b2, patches, c_t, wci_t, wcf_t, wco_t)

    def from_cm(a):  # (Ch, B*H*W) -> (B,H,W,Ch)
        return jnp.transpose(a.reshape(Ch, B, H, W), (1, 2, 3, 0))

    return from_cm(ch_t), from_cm(cc_t)


def _reference(x, h, c, wx, wh, b, wci, wcf, wco):
    """Pure-JAX f32 reference of the PyTorch forward (NHWC)."""
    Ch = h.shape[-1]

    def conv(inp, w):
        return jax.lax.conv_general_dilated(
            inp, w, window_strides=(1, 1), padding="SAME",
            dimension_numbers=("NHWC", "HWIO", "NHWC"))

    g = conv(x, wx) + b + conv(h, wh)
    gi, gf, gc, go = (g[..., i * Ch:(i + 1) * Ch] for i in range(4))
    ci = jax.nn.sigmoid(gi + c * wci)
    cf = jax.nn.sigmoid(gf + c * wcf)
    cc = cf * c + ci * jnp.tanh(gc)
    co = jax.nn.sigmoid(go + cc * wco)
    ch = co * jnp.tanh(cc)
    return ch, cc


if __name__ == "__main__":
    B, Cin, Ch, H, W, K = 2, 4, 32, 16, 16, 3

    key = jax.random.PRNGKey(0)
    keys = jax.random.split(key, 8)

    # Activations (NHWC).
    x = jax.random.normal(keys[0], (B, H, W, Cin), jnp.float32)
    h = jax.random.normal(keys[1], (B, H, W, Ch), jnp.float32)
    c = jax.random.normal(keys[2], (B, H, W, Ch), jnp.float32)

    # Conv weights, PyTorch default-style uniform init, HWIO layout,
    # gates stacked [i, f, c, o] along the output-channel axis.
    bx = 1.0 / jnp.sqrt(float(Cin * K * K))
    bh = 1.0 / jnp.sqrt(float(Ch * K * K))
    wx = jax.random.uniform(keys[3], (K, K, Cin, 4 * Ch), jnp.float32, -bx, bx)
    wh = jax.random.uniform(keys[4], (K, K, Ch, 4 * Ch), jnp.float32, -bh, bh)
    b = jax.random.uniform(keys[5], (4 * Ch,), jnp.float32, -bx, bx)

    # Peephole weights: zero-initialized, as in init_hidden().
    wci = jnp.zeros((1, H, W, Ch), jnp.float32)
    wcf = jnp.zeros((1, H, W, Ch), jnp.float32)
    wco = jnp.zeros((1, H, W, Ch), jnp.float32)

    fwd = jax.jit(functools.partial(conv_lstm_cell, kernel_size=K))
    ch_out, cc_out = fwd(x, h, c, wx, wh, b, wci, wcf, wco)
    jax.block_until_ready((ch_out, cc_out))

    ch_ref, cc_ref = _reference(x, h, c, wx, wh, b, wci, wcf, wco)
    # bf16 matmul operands (f32 accumulation) => loosened tolerance vs f32 ref.
    assert jnp.allclose(ch_out, ch_ref, atol=2e-2, rtol=2e-2), "ch mismatch"
    assert jnp.allclose(cc_out, cc_ref, atol=2e-2, rtol=2e-2), "cc mismatch"

    print("KERNEL_OK")
</pallas_src>

<mosaic_0001>
module attributes {stable_mosaic.version = 11 : i64} {
  func.func @_convlstm_kernel(%arg0: i32, %arg1: memref<128x324xbf16, #tpu.memory_space<vmem>>, %arg2: memref<128x1xf32, #tpu.memory_space<vmem>>, %arg3: memref<324x256xbf16, #tpu.memory_space<vmem>>, %arg4: memref<32x256xf32, #tpu.memory_space<vmem>>, %arg5: memref<32x256xf32, #tpu.memory_space<vmem>>, %arg6: memref<32x256xf32, #tpu.memory_space<vmem>>, %arg7: memref<32x256xf32, #tpu.memory_space<vmem>>, %arg8: memref<32x256xf32, #tpu.memory_space<vmem>>, %arg9: memref<32x256xf32, #tpu.memory_space<vmem>>) attributes {dimension_semantics = [#tpu.dimension_semantics<parallel>], iteration_bounds = array<i64: 2>, scalar_prefetch = 0 : i64, scratch_operands = 0 : i64, tpu.core_type = #tpu.core_type<tc>, window_params = [{pipeline_mode = #tpu.pipeline_mode<synchronous>, transform_indices = @transform_0, window_bounds = array<i64: 128, 324>}, {pipeline_mode = #tpu.pipeline_mode<synchronous>, transform_indices = @transform_1, window_bounds = array<i64: 128, 1>}, {transform_indices = @transform_2, window_bounds = array<i64: 324, 256>}, {transform_indices = @transform_3, window_bounds = array<i64: 32, 256>}, {transform_indices = @transform_4, window_bounds = array<i64: 32, 256>}, {transform_indices = @transform_5, window_bounds = array<i64: 32, 256>}, {transform_indices = @transform_6, window_bounds = array<i64: 32, 256>}, {transform_indices = @transform_7, window_bounds = array<i64: 32, 256>}, {transform_indices = @transform_8, window_bounds = array<i64: 32, 256>}]} {
    %c0 = arith.constant 0 : index
    %c0_0 = arith.constant 0 : index
    %0 = vector.load %arg1[%c0, %c0_0] : memref<128x324xbf16, #tpu.memory_space<vmem>>, vector<128x324xbf16>
    %c0_1 = arith.constant 0 : index
    %c0_2 = arith.constant 0 : index
    %1 = vector.load %arg3[%c0_1, %c0_2] : memref<324x256xbf16, #tpu.memory_space<vmem>>, vector<324x256xbf16>
    %cst = arith.constant dense<0.000000e+00> : vector<128x256xf32>
    %2 = tpu.matmul %0, %1, %cst {dimension_numbers = #tpu.dot_dimension_numbers<[1], [0], [0], [1], [0, 0, 1, 1], [], []>} : vector<128x324xbf16>, vector<324x256xbf16>, vector<128x256xf32> -> vector<128x256xf32>
    %c0_3 = arith.constant 0 : index
    %c0_4 = arith.constant 0 : index
    %3 = vector.load %arg2[%c0_3, %c0_4] : memref<128x1xf32, #tpu.memory_space<vmem>>, vector<128x1xf32>
    %4 = vector.broadcast %3 : vector<128x1xf32> to vector<128x256xf32>
    %5 = arith.addf %2, %4 : vector<128x256xf32>
    %c0_5 = arith.constant 0 : index
    %c0_6 = arith.constant 0 : index
    %6 = vector.load %arg4[%c0_5, %c0_6] : memref<32x256xf32, #tpu.memory_space<vmem>>, vector<32x256xf32>
    %7 = vector.extract_strided_slice %5 {offsets = [0, 0], sizes = [32, 256], strides = [1, 1]} : vector<128x256xf32> to vector<32x256xf32>
    %8 = vector.extract_strided_slice %5 {offsets = [32, 0], sizes = [32, 256], strides = [1, 1]} : vector<128x256xf32> to vector<32x256xf32>
    %9 = vector.extract_strided_slice %5 {offsets = [64, 0], sizes = [32, 256], strides = [1, 1]} : vector<128x256xf32> to vector<32x256xf32>
    %10 = vector.extract_strided_slice %5 {offsets = [96, 0], sizes = [32, 256], strides = [1, 1]} : vector<128x256xf32> to vector<32x256xf32>
    %c0_7 = arith.constant 0 : index
    %c0_8 = arith.constant 0 : index
    %11 = vector.load %arg5[%c0_7, %c0_8] : memref<32x256xf32, #tpu.memory_space<vmem>>, vector<32x256xf32>
    %12 = arith.mulf %6, %11 : vector<32x256xf32>
    %13 = arith.addf %7, %12 : vector<32x256xf32>
    %14 = arith.negf %13 : vector<32x256xf32>
    %15 = math.exp %14 : vector<32x256xf32>
    %cst_9 = arith.constant 1.000000e+00 : f32
    %16 = vector.broadcast %cst_9 : f32 to vector<32x256xf32>
    %17 = arith.addf %16, %15 : vector<32x256xf32>
    %18 = arith.divf %16, %17 : vector<32x256xf32>
    %c0_10 = arith.constant 0 : index
    %c0_11 = arith.constant 0 : index
    %19 = vector.load %arg6[%c0_10, %c0_11] : memref<32x256xf32, #tpu.memory_space<vmem>>, vector<32x256xf32>
    %20 = arith.mulf %6, %19 : vector<32x256xf32>
    %21 = arith.addf %8, %20 : vector<32x256xf32>
    %22 = arith.negf %21 : vector<32x256xf32>
    %23 = math.exp %22 : vector<32x256xf32>
    %cst_12 = arith.constant 1.000000e+00 : f32
    %24 = vector.broadcast %cst_12 : f32 to vector<32x256xf32>
    %25 = arith.addf %24, %23 : vector<32x256xf32>
    %26 = arith.divf %24, %25 : vector<32x256xf32>
    %27 = arith.mulf %26, %6 : vector<32x256xf32>
    %28 = math.tanh %9 : vector<32x256xf32>
    %29 = arith.mulf %18, %28 : vector<32x256xf32>
    %30 = arith.addf %27, %29 : vector<32x256xf32>
    %c0_13 = arith.constant 0 : index
    %c0_14 = arith.constant 0 : index
    %31 = vector.load %arg7[%c0_13, %c0_14] : memref<32x256xf32, #tpu.memory_space<vmem>>, vector<32x256xf32>
    %32 = arith.mulf %30, %31 : vector<32x256xf32>
    %33 = arith.addf %10, %32 : vector<32x256xf32>
    %34 = arith.negf %33 : vector<32x256xf32>
    %35 = math.exp %34 : vector<32x256xf32>
    %cst_15 = arith.constant 1.000000e+00 : f32
    %36 = vector.broadcast %cst_15 : f32 to vector<32x256xf32>
    %37 = arith.addf %36, %35 : vector<32x256xf32>
    %38 = arith.divf %36, %37 : vector<32x256xf32>
    %39 = math.tanh %30 : vector<32x256xf32>
    %40 = arith.mulf %38, %39 : vector<32x256xf32>
    %c0_16 = arith.constant 0 : index
    %c0_17 = arith.constant 0 : index
    %41 = vector.load %arg8[%c0_16, %c0_17] : memref<32x256xf32, #tpu.memory_space<vmem>>, vector<32x256xf32>
    tpu.vector_store %arg8[%c0_16, %c0_17], %40 {strides = array<i32>} : memref<32x256xf32, #tpu.memory_space<vmem>>, vector<32x256xf32>,
    %c0_18 = arith.constant 0 : index
    %c0_19 = arith.constant 0 : index
    %42 = vector.load %arg9[%c0_18, %c0_19] : memref<32x256xf32, #tpu.memory_space<vmem>>, vector<32x256xf32>
    tpu.vector_store %arg9[%c0_18, %c0_19], %30 {strides = array<i32>} : memref<32x256xf32, #tpu.memory_space<vmem>>, vector<32x256xf32>,
    return
  }
  func.func @transform_0(%arg0: i32) -> (i32, i32) {
    %c0_i32 = arith.constant 0 : i32
    %c0_i32_0 = arith.constant 0 : i32
    %c0_i32_1 = arith.constant 0 : i32
    return %c0_i32, %c0_i32_0 : i32, i32
  }
  func.func @transform_1(%arg0: i32) -> (i32, i32) {
    %c0_i32 = arith.constant 0 : i32
    %c0_i32_0 = arith.constant 0 : i32
    %c0_i32_1 = arith.constant 0 : i32
    return %c0_i32, %c0_i32_0 : i32, i32
  }
  func.func @transform_2(%arg0: i32) -> (i32, i32) {
    %c0_i32 = arith.constant 0 : i32
    %c0_i32_0 = arith.constant 0 : i32
    return %c0_i32, %arg0 : i32, i32
  }
  func.func @transform_3(%arg0: i32) -> (i32, i32) {
    %c0_i32 = arith.constant 0 : i32
    %c0_i32_0 = arith.constant 0 : i32
    return %c0_i32, %arg0 : i32, i32
  }
  func.func @transform_4(%arg0: i32) -> (i32, i32) {
    %c0_i32 = arith.constant 0 : i32
    %c0_i32_0 = arith.constant 0 : i32
    return %c0_i32, %arg0 : i32, i32
  }
  func.func @transform_5(%arg0: i32) -> (i32, i32) {
    %c0_i32 = arith.constant 0 : i32
    %c0_i32_0 = arith.constant 0 : i32
    return %c0_i32, %arg0 : i32, i32
  }
  func.func @transform_6(%arg0: i32) -> (i32, i32) {
    %c0_i32 = arith.constant 0 : i32
    %c0_i32_0 = arith.constant 0 : i32
    return %c0_i32, %arg0 : i32, i32
  }
  func.func @transform_7(%arg0: i32) -> (i32, i32) {
    %c0_i32 = arith.constant 0 : i32
    %c0_i32_0 = arith.constant 0 : i32
    return %c0_i32, %arg0 : i32, i32
  }
  func.func @transform_8(%arg0: i32) -> (i32, i32) {
    %c0_i32 = arith.constant 0 : i32
    %c0_i32_0 = arith.constant 0 : i32
    return %c0_i32, %arg0 : i32, i32
  }
}

</mosaic_0001>

<llo_original>
// kernel: conv_lstm_cell.1
$region0: #{conv_lstm_cell.1}
  #allocation0 [shape = 'u32[]', space=smem, size = 0x4, offset = 0x4, fixed_abs, tag = 'smem constant byte address 0x4 - core index']
  #allocation1 [shape = 'u32[144,128]{1,0:T(1,128)}', space=vmem, size = 0x12000, scoped, tag = 'internal scratch']
  %s0 = inlined_call_operand.vmem [shape: bf16[128,324], index: 0, kind: input, shape index: {}]
  %s1 = inlined_call_operand.vmem [shape: f32[128,1], index: 1, kind: input, shape index: {}]
  %s2 = inlined_call_operand.vmem [shape: bf16[324,512], index: 2, kind: input, shape index: {}]
  %s3 = inlined_call_operand.vmem [shape: f32[32,512], index: 3, kind: input, shape index: {}]
  %s4 = inlined_call_operand.vmem [shape: f32[32,512], index: 4, kind: input, shape index: {}]
  %s5 = inlined_call_operand.vmem [shape: f32[32,512], index: 5, kind: input, shape index: {}]
  %s6 = inlined_call_operand.vmem [shape: f32[32,512], index: 6, kind: input, shape index: {}]
  %s7 = inlined_call_operand.vmem [shape: f32[32,512], index: 7, kind: output, shape index: {0}]
  %s8 = inlined_call_operand.vmem [shape: f32[32,512], index: 8, kind: output, shape index: {1}]
  %9 = xla_tuple %s7, %s8
  %s10 = sld [smem:[#allocation0]]
  $region237: #{conv_lstm_cell.1} parent=0
    _
  %s12 = ssub.s32 1, %s10
  %s13 = scalar_select 0, %s12, %s10
  $region1: #{conv_lstm_cell.1} parent=0
    #allocation2 [shape = 'u8[335872]{0}', space=vmem, size = 0x52000, scoped, tag = 'input window, operand 2']
    #allocation3 [shape = 'u8[65536]{0}', space=vmem, size = 0x10000, scoped, tag = 'input window, operand 3']
    #allocation4 [shape = 'u8[65536]{0}', space=vmem, size = 0x10000, scoped, tag = 'input window, operand 4']
    #allocation5 [shape = 'u8[65536]{0}', space=vmem, size = 0x10000, scoped, tag = 'input window, operand 5']
    #allocation6 [shape = 'u8[65536]{0}', space=vmem, size = 0x10000, scoped, tag = 'input window, operand 6']
    #allocation7 [shape = 'u8[65536]{0}', space=vmem, size = 0x10000, scoped, tag = 'output window, operand 0']
    #allocation8 [shape = 'u8[65536]{0}', space=vmem, size = 0x10000, scoped, tag = 'output window, operand 1']
    loop: start=0, step=1, limit=4
    $region2: #{conv_lstm_cell.1} parent=1 // loop_pre_header
      _
    $region3: #{conv_lstm_cell.1} parent=1 // loop_header
      %s15 = sphi 0, %s19
      %p16 = scmp.ge.s32.totalorder %s15, 4
      %s23 = sphi 0, %s23
      %s25 = sphi 0, %s23
      %s26 = sphi 0, %s25
      %s40 = sphi 0, %s26
      %s44 = sphi 0, %s44
      %s46 = sphi 0, %s44
      %s47 = sphi 0, %s46
      %s61 = sphi 0, %s47
      %s67 = sphi 0, %s69
      %s70 = sphi 0, %s67
      %s71 = sphi 0, %s70
      %s87 = sphi 0, %s71
      %s93 = sphi 0, %s95
      %s96 = sphi 0, %s93
      %s97 = sphi 0, %s96
      %s113 = sphi 0, %s97
      %s119 = sphi 0, %s121
      %s122 = sphi 0, %s119
      %s123 = sphi 0, %s122
      %s139 = sphi 0, %s123
      %s145 = sphi 0, %s147
      %s148 = sphi 0, %s145
      %s149 = sphi 0, %s148
      %s165 = sphi 0, %s149
      %s171 = sphi 0, %s173
      %s174 = sphi 0, %s171
      %s175 = sphi 0, %s174
      %s191 = sphi 0, %s175
      %s197 = sphi 0, %s199
      %s200 = sphi 0, %s197
      %s201 = sphi 0, %s200
      %s217 = sphi 0, %s201
      %s223 = sphi 0, %s225
      %s226 = sphi 0, %s223
      %s227 = sphi 0, %s226
      %s243 = sphi 0, %s227
    $region4: #{conv_lstm_cell.1} parent=1 // loop_header_branch
      %18 = sbr.rel (%p16) target = $region8
    $region5: #{conv_lstm_cell.1} parent=1 // loop_body
      %s20 = ssub.s32 %s15, 1
      %s21 = ssub.s32 %s15, 2
      %s22 = sadd.s32 %s15, 1
      %s24 = sadd.s32 %s23, 1
      %p27 = scmp.eq.s32.totalorder %s15, 1
      %p28 = scmp.ne.s32.totalorder %s23, %s25
      %p29 = scmp.eq.s32.totalorder %s15, 0
      %p30 = por %p28, %p29
      %p31 = scmp.ne.s32.totalorder %s23, %s25
      %p32 = scmp.eq.s32.totalorder %s20, 1
      %p33 = por %p31, %p32
      %p34 = scmp.ne.s32.totalorder %s25, %s26
      %p35 = scmp.eq.s32.totalorder %s20, 0
      %p36 = por %p34, %p35
      %p37 = scmp.ne.s32.totalorder %s25, %s26
      %p38 = scmp.eq.s32.totalorder %s21, 1
      %p39 = por %p37, %p38
      %p41 = scmp.ne.s32.totalorder %s26, %s40
      %p42 = scmp.eq.s32.totalorder %s21, 0
      %p43 = por %p41, %p42
      %s45 = sadd.s32 %s44, 1
      %p48 = scmp.eq.s32.totalorder %s15, 1
      %p49 = scmp.ne.s32.totalorder %s44, %s46
      %p50 = scmp.eq.s32.totalorder %s15, 0
      %p51 = por %p49, %p50
      %p52 = scmp.ne.s32.totalorder %s44, %s46
      %p53 = scmp.eq.s32.totalorder %s20, 1
      %p54 = por %p52, %p53
      %p55 = scmp.ne.s32.totalorder %s46, %s47
      %p56 = scmp.eq.s32.totalorder %s20, 0
      %p57 = por %p55, %p56
      %p58 = scmp.ne.s32.totalorder %s46, %s47
      %p59 = scmp.eq.s32.totalorder %s21, 1
      %p60 = por %p58, %p59
      %p62 = scmp.ne.s32.totalorder %s47, %s61
      %p63 = scmp.eq.s32.totalorder %s21, 0
      %p64 = por %p62, %p63
      %s65 = ssub.s32 %s15, %s22
      %p66 = scmp.eq.s32.totalorder %s65, 0
      %s68 = sadd.s32 %s67, 1
      %s69 = scalar_select %p66, %s67, %s68
      %p72 = pneg %p66
      %p73 = scmp.eq.s32.totalorder %s15, 1
      %p74 = por %p72, %p73
      %p75 = scmp.ne.s32.totalorder %s67, %s70
      %p76 = scmp.eq.s32.totalorder %s15, 0
      %p77 = por %p75, %p76
      %p78 = scmp.ne.s32.totalorder %s67, %s70
      %p79 = scmp.eq.s32.totalorder %s20, 1
      %p80 = por %p78, %p79
      %p81 = scmp.ne.s32.totalorder %s70, %s71
      %p82 = scmp.eq.s32.totalorder %s20, 0
      %p83 = por %p81, %p82
      %p84 = scmp.ne.s32.totalorder %s70, %s71
      %p85 = scmp.eq.s32.totalorder %s21, 1
      %p86 = por %p84, %p85
      %p88 = scmp.ne.s32.totalorder %s71, %s87
      %p89 = scmp.eq.s32.totalorder %s21, 0
      %p90 = por %p88, %p89
      %s91 = ssub.s32 %s15, %s22
      %p92 = scmp.eq.s32.totalorder %s91, 0
      %s94 = sadd.s32 %s93, 1
      %s95 = scalar_select %p92, %s93, %s94
      %p98 = pneg %p92
      %p99 = scmp.eq.s32.totalorder %s15, 1
      %p100 = por %p98, %p99
      %p101 = scmp.ne.s32.totalorder %s93, %s96
      %p102 = scmp.eq.s32.totalorder %s15, 0
      %p103 = por %p101, %p102
      %p104 = scmp.ne.s32.totalorder %s93, %s96
      %p105 = scmp.eq.s32.totalorder %s20, 1
      %p106 = por %p104, %p105
      %p107 = scmp.ne.s32.totalorder %s96, %s97
      %p108 = scmp.eq.s32.totalorder %s20, 0
      %p109 = por %p107, %p108
      %p110 = scmp.ne.s32.totalorder %s96, %s97
      %p111 = scmp.eq.s32.totalorder %s21, 1
      %p112 = por %p110, %p111
      %p114 = scmp.ne.s32.totalorder %s97, %s113
      %p115 = scmp.eq.s32.totalorder %s21, 0
      %p116 = por %p114, %p115
      %s117 = ssub.s32 %s15, %s22
      %p118 = scmp.eq.s32.totalorder %s117, 0
      %s120 = sadd.s32 %s119, 1
      %s121 = scalar_select %p118, %s119, %s120
      %p124 = pneg %p118
      %p125 = scmp.eq.s32.totalorder %s15, 1
      %p126 = por %p124, %p125
      %p127 = scmp.ne.s32.totalorder %s119, %s122
      %p128 = scmp.eq.s32.totalorder %s15, 0
      %p129 = por %p127, %p128
      %p130 = scmp.ne.s32.totalorder %s119, %s122
      %p131 = scmp.eq.s32.totalorder %s20, 1
      %p132 = por %p130, %p131
      %p133 = scmp.ne.s32.totalorder %s122, %s123
      %p134 = scmp.eq.s32.totalorder %s20, 0
      %p135 = por %p133, %p134
      %p136 = scmp.ne.s32.totalorder %s122, %s123
      %p137 = scmp.eq.s32.totalorder %s21, 1
      %p138 = por %p136, %p137
      %p140 = scmp.ne.s32.totalorder %s123, %s139
      %p141 = scmp.eq.s32.totalorder %s21, 0
      %p142 = por %p140, %p141
      %s143 = ssub.s32 %s15, %s22
      %p144 = scmp.eq.s32.totalorder %s143, 0
      %s146 = sadd.s32 %s145, 1
      %s147 = scalar_select %p144, %s145, %s146
      %p150 = pneg %p144
      %p151 = scmp.eq.s32.totalorder %s15, 1
      %p152 = por %p150, %p151
      %p153 = scmp.ne.s32.totalorder %s145, %s148
      %p154 = scmp.eq.s32.totalorder %s15, 0
      %p155 = por %p153, %p154
      %p156 = scmp.ne.s32.totalorder %s145, %s148
      %p157 = scmp.eq.s32.totalorder %s20, 1
      %p158 = por %p156, %p157
      %p159 = scmp.ne.s32.totalorder %s148, %s149
      %p160 = scmp.eq.s32.totalorder %s20, 0
      %p161 = por %p159, %p160
      %p162 = scmp.ne.s32.totalorder %s148, %s149
      %p163 = scmp.eq.s32.totalorder %s21, 1
      %p164 = por %p162, %p163
      %p166 = scmp.ne.s32.totalorder %s149, %s165
      %p167 = scmp.eq.s32.totalorder %s21, 0
      %p168 = por %p166, %p167
      %s169 = ssub.s32 %s15, %s22
      %p170 = scmp.eq.s32.totalorder %s169, 0
      %s172 = sadd.s32 %s171, 1
      %s173 = scalar_select %p170, %s171, %s172
      %p176 = pneg %p170
      %p177 = scmp.eq.s32.totalorder %s15, 1
      %p178 = por %p176, %p177
      %p179 = scmp.ne.s32.totalorder %s171, %s174
      %p180 = scmp.eq.s32.totalorder %s15, 0
      %p181 = por %p179, %p180
      %p182 = scmp.ne.s32.totalorder %s171, %s174
      %p183 = scmp.eq.s32.totalorder %s20, 1
      %p184 = por %p182, %p183
      %p185 = scmp.ne.s32.totalorder %s174, %s175
      %p186 = scmp.eq.s32.totalorder %s20, 0
      %p187 = por %p185, %p186
      %p188 = scmp.ne.s32.totalorder %s174, %s175
      %p189 = scmp.eq.s32.totalorder %s21, 1
      %p190 = por %p188, %p189
      %p192 = scmp.ne.s32.totalorder %s175, %s191
      %p193 = scmp.eq.s32.totalorder %s21, 0
      %p194 = por %p192, %p193
      %s195 = ssub.s32 %s15, %s22
      %p196 = scmp.eq.s32.totalorder %s195, 0
      %s198 = sadd.s32 %s197, 1
      %s199 = scalar_select %p196, %s197, %s198
      %p202 = pneg %p196
      %p203 = scmp.eq.s32.totalorder %s15, 1
      %p204 = por %p202, %p203
      %p205 = scmp.ne.s32.totalorder %s197, %s200
      %p206 = scmp.eq.s32.totalorder %s15, 0
      %p207 = por %p205, %p206
      %p208 = scmp.ne.s32.totalorder %s197, %s200
      %p209 = scmp.eq.s32.totalorder %s20, 1
      %p210 = por %p208, %p209
      %p211 = scmp.ne.s32.totalorder %s200, %s201
      %p212 = scmp.eq.s32.totalorder %s20, 0
      %p213 = por %p211, %p212
      %p214 = scmp.ne.s32.totalorder %s200, %s201
      %p215 = scmp.eq.s32.totalorder %s21, 1
      %p216 = por %p214, %p215
      %p218 = scmp.ne.s32.totalorder %s201, %s217
      %p219 = scmp.eq.s32.totalorder %s21, 0
      %p220 = por %p218, %p219
      %s221 = ssub.s32 %s15, %s22
      %p222 = scmp.eq.s32.totalorder %s221, 0
      %s224 = sadd.s32 %s223, 1
      %s225 = scalar_select %p222, %s223, %s224
      %p228 = pneg %p222
      %p229 = scmp.eq.s32.totalorder %s15, 1
      %p230 = por %p228, %p229
      %p231 = scmp.ne.s32.totalorder %s223, %s226
      %p232 = scmp.eq.s32.totalorder %s15, 0
      %p233 = por %p231, %p232
      %p234 = scmp.ne.s32.totalorder %s223, %s226
      %p235 = scmp.eq.s32.totalorder %s20, 1
      %p236 = por %p234, %p235
      %p237 = scmp.ne.s32.totalorder %s226, %s227
      %p238 = scmp.eq.s32.totalorder %s20, 0
      %p239 = por %p237, %p238
      %p240 = scmp.ne.s32.totalorder %s226, %s227
      %p241 = scmp.eq.s32.totalorder %s21, 1
      %p242 = por %p240, %p241
      %p244 = scmp.ne.s32.totalorder %s227, %s243
      %p245 = scmp.eq.s32.totalorder %s21, 0
      %p246 = por %p244, %p245
      %p247 = scmp.le.s32.totalorder 1, %s15
      %p248 = scmp.lt.s32.totalorder %s15, 3
      %p249 = pnand %p247, %p248
      %p250 = pneg %p249
      // Predicated region
      $region9: #{conv_lstm_cell.1} parent=5 // pred_check
        _
      $region10: #{conv_lstm_cell.1} parent=5 // pred_check_branch
        %252 = sbr.rel (%p249) target = $region12
      $region11: #{conv_lstm_cell.1} parent=5 // pred_region
        %s253 = ssub.s32 %s15, 1
        // Predicated region
        $region13: #{conv_lstm_cell.1} parent=11 // pred_check
          %p254 = pneg %p36
        $region14: #{conv_lstm_cell.1} parent=11 // pred_check_branch
          %256 = sbr.rel (%p254) target = $region16
        $region15: #{conv_lstm_cell.1} parent=11 // pred_region
          _
        $region16: #{conv_lstm_cell.1} parent=11 // pred_fallthru
          _
        // Predicated region
        $region17: #{conv_lstm_cell.1} parent=11 // pred_check
          %p257 = pneg %p57
        $region18: #{conv_lstm_cell.1} parent=11 // pred_check_branch
          %259 = sbr.rel (%p257) target = $region20
        $region19: #{conv_lstm_cell.1} parent=11 // pred_region
          _
        $region20: #{conv_lstm_cell.1} parent=11 // pred_fallthru
          _
      $region12: #{conv_lstm_cell.1} parent=5 // pred_fallthru
        _
      %p260 = scmp.lt.s32.totalorder %s15, 2
      // Predicated region
      $region21: #{conv_lstm_cell.1} parent=5 // pred_check
        %p261 = pneg %p260
      $region22: #{conv_lstm_cell.1} parent=5 // pred_check_branch
        %263 = sbr.rel (%p261) target = $region24
      $region23: #{conv_lstm_cell.1} parent=5 // pred_region
        // Predicated region
        $region25: #{conv_lstm_cell.1} parent=23 // pred_check
          %p264 = pneg %p77
        $region26: #{conv_lstm_cell.1} parent=23 // pred_check_branch
          %266 = sbr.rel (%p264) target = $region28
        $region27: #{conv_lstm_cell.1} parent=23 // pred_region
          %s267 = sand.u32 %s67, 1
          %s268 = sand.u32 %s67, 1
          %s269 = smul.addr %s268, 328
          %s270 = scalar_lea.vmem [#allocation2], %s269
          %s271 = smul.u32 2, %s15
          %s272 = smul.addr %s271, 4
          %s273 = scalar_lea.vmem %s2, %s272
          // Predicated region
          $region29: #{conv_lstm_cell.1} parent=27 // pred_check
            _
          $region30: #{conv_lstm_cell.1} parent=27 // pred_check_branch
            %275 = sbr.rel (0) target = $region32
          $region31: #{conv_lstm_cell.1} parent=27 // pred_region
            // Predicated region
            $region33: #{conv_lstm_cell.1} parent=31 // pred_check
              _
            $region34: #{conv_lstm_cell.1} parent=31 // pred_check_branch
              %277 = sbr.rel (0) target = $region36
            $region35: #{conv_lstm_cell.1} parent=31 // pred_region
              // Predicated region
              $region48: #{conv_lstm_cell.1} parent=35 // pred_check
                _
              $region49: #{conv_lstm_cell.1} parent=35 // pred_check_branch
                %372 = sbr.rel (0) target = $region51
              $region50: #{conv_lstm_cell.1} parent=35 // pred_region
                loop: start=0, step=1, limit=1
                $region52: #{conv_lstm_cell.1} parent=50 // loop_pre_header
                  _
                $region53: #{conv_lstm_cell.1} parent=50 // loop_header
                  %s374 = sphi 0, %s378
                  %p375 = scmp.ge.s32.totalorder %s374, 1
                  %s379 = sphi %s273, %s273
                  %s380 = sphi %s270, %s270
                $region54: #{conv_lstm_cell.1} parent=50 // loop_header_branch
                  %377 = sbr.rel (%p375) target = $region58
                $region55: #{conv_lstm_cell.1} parent=50 // loop_body
                  %v381 = vld [vmem:[%s379] sm:$0xff]
                  %382 = vst [vmem:[%s380] sm:$0xff] %v381
                  %v383 = vld [vmem:[%s379 + $0x10] sm:$0xff]
                  %384 = vst [vmem:[%s380 + $0x8] sm:$0xff] %v383
                  %v385 = vld [vmem:[%s379 + $0x20] sm:$0xff]
                  %386 = vst [vmem:[%s380 + $0x10] sm:$0xff] %v385
                  %v387 = vld [vmem:[%s379 + $0x30] sm:$0xff]
                  %388 = vst [vmem:[%s380 + $0x18] sm:$0xff] %v387
                  %v389 = vld [vmem:[%s379 + $0x40] sm:$0xff]
                  %390 = vst [vmem:[%s380 + $0x20] sm:$0xff] %v389
                  %v391 = vld [vmem:[%s379 + $0x50] sm:$0xff]
                  %392 = vst [vmem:[%s380 + $0x28] sm:$0xff] %v391
                  %v393 = vld [vmem:[%s379 + $0x60] sm:$0xff]
                  %394 = vst [vmem:[%s380 + $0x30] sm:$0xff] %v393
                  %v395 = vld [vmem:[%s379 + $0x70] sm:$0xff]
                  %396 = vst [vmem:[%s380 + $0x38] sm:$0xff] %v395
                  %v397 = vld [vmem:[%s379 + $0x80] sm:$0xff]
                  %398 = vst [vmem:[%s380 + $0x40] sm:$0xff] %v397
                  %v399 = vld [vmem:[%s379 + $0x90] sm:$0xff]
                  %400 = vst [vmem:[%s380 + $0x48] sm:$0xff] %v399
                  %v401 = vld [vmem:[%s379 + $0xa0] sm:$0xff]
                  %402 = vst [vmem:[%s380 + $0x50] sm:$0xff] %v401
                  %v403 = vld [vmem:[%s379 + $0xb0] sm:$0xff]
                  %404 = vst [vmem:[%s380 + $0x58] sm:$0xff] %v403
                  %v405 = vld [vmem:[%s379 + $0xc0] sm:$0xff]
                  %406 = vst [vmem:[%s380 + $0x60] sm:$0xff] %v405
                  %v407 = vld [vmem:[%s379 + $0xd0] sm:$0xff]
                  %408 = vst [vmem:[%s380 + $0x68] sm:$0xff] %v407
                  %v409 = vld [vmem:[%s379 + $0xe0] sm:$0xff]
                  %410 = vst [vmem:[%s380 + $0x70] sm:$0xff] %v409
                  %v411 = vld [vmem:[%s379 + $0xf0] sm:$0xff]
                  %412 = vst [vmem:[%s380 + $0x78] sm:$0xff] %v411
                  %v413 = vld [vmem:[%s379 + $0x100] sm:$0xff]
                  %414 = vst [vmem:[%s380 + $0x80] sm:$0xff] %v413
                  %v415 = vld [vmem:[%s379 + $0x110] sm:$0xff]
                  %416 = vst [vmem:[%s380 + $0x88] sm:$0xff] %v415
                  %v417 = vld [vmem:[%s379 + $0x120] sm:$0xff]
                  %418 = vst [vmem:[%s380 + $0x90] sm:$0xff] %v417
                  %v419 = vld [vmem:[%s379 + $0x130] sm:$0xff]
                  %420 = vst [vmem:[%s380 + $0x98] sm:$0xff] %v419
                  %v421 = vld [vmem:[%s379 + $0x140] sm:$0xff]
                  %422 = vst [vmem:[%s380 + $0xa0] sm:$0xff] %v421
                  %v423 = vld [vmem:[%s379 + $0x150] sm:$0xff]
                  %424 = vst [vmem:[%s380 + $0xa8] sm:$0xff] %v423
                  %v425 = vld [vmem:[%s379 + $0x160] sm:$0xff]
                  %426 = vst [vmem:[%s380 + $0xb0] sm:$0xff] %v425
                  %v427 = vld [vmem:[%s379 + $0x170] sm:$0xff]
                  %428 = vst [vmem:[%s380 + $0xb8] sm:$0xff] %v427
                  %v429 = vld [vmem:[%s379 + $0x180] sm:$0xff]
                  %430 = vst [vmem:[%s380 + $0xc0] sm:$0xff] %v429
                  %v431 = vld [vmem:[%s379 + $0x190] sm:$0xff]
                  %432 = vst [vmem:[%s380 + $0xc8] sm:$0xff] %v431
                  %v433 = vld [vmem:[%s379 + $0x1a0] sm:$0xff]
                  %434 = vst [vmem:[%s380 + $0xd0] sm:$0xff] %v433
                  %v435 = vld [vmem:[%s379 + $0x1b0] sm:$0xff]
                  %436 = vst [vmem:[%s380 + $0xd8] sm:$0xff] %v435
                  %v437 = vld [vmem:[%s379 + $0x1c0] sm:$0xff]
                  %438 = vst [vmem:[%s380 + $0xe0] sm:$0xff] %v437
                  %v439 = vld [vmem:[%s379 + $0x1d0] sm:$0xff]
                  %440 = vst [vmem:[%s380 + $0xe8] sm:$0xff] %v439
                  %v441 = vld [vmem:[%s379 + $0x1e0] sm:$0xff]
                  %442 = vst [vmem:[%s380 + $0xf0] sm:$0xff] %v441
                  %v443 = vld [vmem:[%s379 + $0x1f0] sm:$0xff]
                  %444 = vst [vmem:[%s380 + $0xf8] sm:$0xff] %v443
                  %v445 = vld [vmem:[%s379 + $0x200] sm:$0xff]
                  %446 = vst [vmem:[%s380 + $0x100] sm:$0xff] %v445
                  %v447 = vld [vmem:[%s379 + $0x210] sm:$0xff]
                  %448 = vst [vmem:[%s380 + $0x108] sm:$0xff] %v447
                  %v449 = vld [vmem:[%s379 + $0x220] sm:$0xff]
                  %450 = vst [vmem:[%s380 + $0x110] sm:$0xff] %v449
                  %v451 = vld [vmem:[%s379 + $0x230] sm:$0xff]
                  %452 = vst [vmem:[%s380 + $0x118] sm:$0xff] %v451
                  %v453 = vld [vmem:[%s379 + $0x240] sm:$0xff]
                  %454 = vst [vmem:[%s380 + $0x120] sm:$0xff] %v453
                  %v455 = vld [vmem:[%s379 + $0x250] sm:$0xff]
                  %456 = vst [vmem:[%s380 + $0x128] sm:$0xff] %v455
                  %v457 = vld [vmem:[%s379 + $0x260] sm:$0xff]
                  %458 = vst [vmem:[%s380 + $0x130] sm:$0xff] %v457
                  %v459 = vld [vmem:[%s379 + $0x270] sm:$0xff]
                  %460 = vst [vmem:[%s380 + $0x138] sm:$0xff] %v459
                  %v461 = vld [vmem:[%s379 + $0x280] sm:$0xff]
                  %462 = vst [vmem:[%s380 + $0x140] sm:$0xff] %v461
                $region56: #{conv_lstm_cell.1} parent=50 // loop_footer
                  %s378 = sadd.s32 1, %s374
                $region57: #{conv_lstm_cell.1} parent=50 // loop_footer_branch
                  %373 = sbr.rel target = $region53
                $region58: #{conv_lstm_cell.1} parent=50 // loop_exit
                  _
              $region51: #{conv_lstm_cell.1} parent=35 // pred_fallthru
                _
              // Predicated region
              $region59: #{conv_lstm_cell.1} parent=35 // pred_check
                _
              $region60: #{conv_lstm_cell.1} parent=35 // pred_check_branch
                %464 = sbr.rel target = $region62
              $region61: #{conv_lstm_cell.1} parent=35 // pred_region
                _
              $region62: #{conv_lstm_cell.1} parent=35 // pred_fallthru
                _
            $region36: #{conv_lstm_cell.1} parent=31 // pred_fallthru
              _
            // Predicated region
            $region37: #{conv_lstm_cell.1} parent=31 // pred_check
              _
            $region38: #{conv_lstm_cell.1} parent=31 // pred_check_branch
              %279 = sbr.rel target = $region40
            $region39: #{conv_lstm_cell.1} parent=31 // pred_region
              loop: start=0, step=1, limit=1
              $region41: #{conv_lstm_cell.1} parent=39 // loop_pre_header
                _
              $region42: #{conv_lstm_cell.1} parent=39 // loop_header
                %s282 = sphi 0, %s286
                %p283 = scmp.ge.s32.totalorder %s282, 1
                %s287 = sphi %s273, %s273
                %s288 = sphi %s270, %s270
              $region43: #{conv_lstm_cell.1} parent=39 // loop_header_branch
                %285 = sbr.rel (%p283) target = $region47
              $region44: #{conv_lstm_cell.1} parent=39 // loop_body
                %v289 = vld [vmem:[%s287] sm:$0xff]
                %290 = vst [vmem:[%s288] sm:$0xff] %v289
                %v291 = vld [vmem:[%s287 + $0x10] sm:$0xff]
                %292 = vst [vmem:[%s288 + $0x8] sm:$0xff] %v291
                %v293 = vld [vmem:[%s287 + $0x20] sm:$0xff]
                %294 = vst [vmem:[%s288 + $0x10] sm:$0xff] %v293
                %v295 = vld [vmem:[%s287 + $0x30] sm:$0xff]
                %296 = vst [vmem:[%s288 + $0x18] sm:$0xff] %v295
                %v297 = vld [vmem:[%s287 + $0x40] sm:$0xff]
                %298 = vst [vmem:[%s288 + $0x20] sm:$0xff] %v297
                %v299 = vld [vmem:[%s287 + $0x50] sm:$0xff]
                %300 = vst [vmem:[%s288 + $0x28] sm:$0xff] %v299
                %v301 = vld [vmem:[%s287 + $0x60] sm:$0xff]
                %302 = vst [vmem:[%s288 + $0x30] sm:$0xff] %v301
                %v303 = vld [vmem:[%s287 + $0x70] sm:$0xff]
                %304 = vst [vmem:[%s288 + $0x38] sm:$0xff] %v303
                %v305 = vld [vmem:[%s287 + $0x80] sm:$0xff]
                %306 = vst [vmem:[%s288 + $0x40] sm:$0xff] %v305
                %v307 = vld [vmem:[%s287 + $0x90] sm:$0xff]
                %308 = vst [vmem:[%s288 + $0x48] sm:$0xff] %v307
                %v309 = vld [vmem:[%s287 + $0xa0] sm:$0xff]
                %310 = vst [vmem:[%s288 + $0x50] sm:$0xff] %v309
                %v311 = vld [vmem:[%s287 + $0xb0] sm:$0xff]
                %312 = vst [vmem:[%s288 + $0x58] sm:$0xff] %v311
                %v313 = vld [vmem:[%s287 + $0xc0] sm:$0xff]
                %314 = vst [vmem:[%s288 + $0x60] sm:$0xff] %v313
                %v315 = vld [vmem:[%s287 + $0xd0] sm:$0xff]
                %316 = vst [vmem:[%s288 + $0x68] sm:$0xff] %v315
                %v317 = vld [vmem:[%s287 + $0xe0] sm:$0xff]
                %318 = vst [vmem:[%s288 + $0x70] sm:$0xff] %v317
                %v319 = vld [vmem:[%s287 + $0xf0] sm:$0xff]
                %320 = vst [vmem:[%s288 + $0x78] sm:$0xff] %v319
                %v321 = vld [vmem:[%s287 + $0x100] sm:$0xff]
                %322 = vst [vmem:[%s288 + $0x80] sm:$0xff] %v321
                %v323 = vld [vmem:[%s287 + $0x110] sm:$0xff]
                %324 = vst [vmem:[%s288 + $0x88] sm:$0xff] %v323
                %v325 = vld [vmem:[%s287 + $0x120] sm:$0xff]
                %326 = vst [vmem:[%s288 + $0x90] sm:$0xff] %v325
                %v327 = vld [vmem:[%s287 + $0x130] sm:$0xff]
                %328 = vst [vmem:[%s288 + $0x98] sm:$0xff] %v327
                %v329 = vld [vmem:[%s287 + $0x140] sm:$0xff]
                %330 = vst [vmem:[%s288 + $0xa0] sm:$0xff] %v329
                %v331 = vld [vmem:[%s287 + $0x150] sm:$0xff]
                %332 = vst [vmem:[%s288 + $0xa8] sm:$0xff] %v331
                %v333 = vld [vmem:[%s287 + $0x160] sm:$0xff]
                %334 = vst [vmem:[%s288 + $0xb0] sm:$0xff] %v333
                %v335 = vld [vmem:[%s287 + $0x170] sm:$0xff]
                %336 = vst [vmem:[%s288 + $0xb8] sm:$0xff] %v335
                %v337 = vld [vmem:[%s287 + $0x180] sm:$0xff]
                %338 = vst [vmem:[%s288 + $0xc0] sm:$0xff] %v337
                %v339 = vld [vmem:[%s287 + $0x190] sm:$0xff]
                %340 = vst [vmem:[%s288 + $0xc8] sm:$0xff] %v339
                %v341 = vld [vmem:[%s287 + $0x1a0] sm:$0xff]
                %342 = vst [vmem:[%s288 + $0xd0] sm:$0xff] %v341
                %v343 = vld [vmem:[%s287 + $0x1b0] sm:$0xff]
                %344 = vst [vmem:[%s288 + $0xd8] sm:$0xff] %v343
                %v345 = vld [vmem:[%s287 + $0x1c0] sm:$0xff]
                %346 = vst [vmem:[%s288 + $0xe0] sm:$0xff] %v345
                %v347 = vld [vmem:[%s287 + $0x1d0] sm:$0xff]
                %348 = vst [vmem:[%s288 + $0xe8] sm:$0xff] %v347
                %v349 = vld [vmem:[%s287 + $0x1e0] sm:$0xff]
                %350 = vst [vmem:[%s288 + $0xf0] sm:$0xff] %v349
                %v351 = vld [vmem:[%s287 + $0x1f0] sm:$0xff]
                %352 = vst [vmem:[%s288 + $0xf8] sm:$0xff] %v351
                %v353 = vld [vmem:[%s287 + $0x200] sm:$0xff]
                %354 = vst [vmem:[%s288 + $0x100] sm:$0xff] %v353
                %v355 = vld [vmem:[%s287 + $0x210] sm:$0xff]
                %356 = vst [vmem:[%s288 + $0x108] sm:$0xff] %v355
                %v357 = vld [vmem:[%s287 + $0x220] sm:$0xff]
                %358 = vst [vmem:[%s288 + $0x110] sm:$0xff] %v357
                %v359 = vld [vmem:[%s287 + $0x230] sm:$0xff]
                %360 = vst [vmem:[%s288 + $0x118] sm:$0xff] %v359
                %v361 = vld [vmem:[%s287 + $0x240] sm:$0xff]
                %362 = vst [vmem:[%s288 + $0x120] sm:$0xff] %v361
                %v363 = vld [vmem:[%s287 + $0x250] sm:$0xff]
                %364 = vst [vmem:[%s288 + $0x128] sm:$0xff] %v363
                %v365 = vld [vmem:[%s287 + $0x260] sm:$0xff]
                %366 = vst [vmem:[%s288 + $0x130] sm:$0xff] %v365
                %v367 = vld [vmem:[%s287 + $0x270] sm:$0xff]
                %368 = vst [vmem:[%s288 + $0x138] sm:$0xff] %v367
                %v369 = vld [vmem:[%s287 + $0x280] sm:$0xff]
                %370 = vst [vmem:[%s288 + $0x140] sm:$0xff] %v369
              $region45: #{conv_lstm_cell.1} parent=39 // loop_footer
                %s286 = sadd.s32 1, %s282
              $region46: #{conv_lstm_cell.1} parent=39 // loop_footer_branch
                %281 = sbr.rel target = $region42
              $region47: #{conv_lstm_cell.1} parent=39 // loop_exit
                _
            $region40: #{conv_lstm_cell.1} parent=31 // pred_fallthru
              _
          $region32: #{conv_lstm_cell.1} parent=27 // pred_fallthru
            _
          %465 = vnop
        $region28: #{conv_lstm_cell.1} parent=23 // pred_fallthru
          _
        // Predicated region
        $region63: #{conv_lstm_cell.1} parent=23 // pred_check
          %p466 = pneg %p103
        $region64: #{conv_lstm_cell.1} parent=23 // pred_check_branch
          %468 = sbr.rel (%p466) target = $region66
        $region65: #{conv_lstm_cell.1} parent=23 // pred_region
          %s469 = sand.u32 %s93, 1
          %s470 = sand.u32 %s93, 1
          %s471 = smul.addr %s470, 64
          %s472 = scalar_lea.vmem [#allocation3], %s471
          %s473 = smul.u32 2, %s15
          %s474 = smul.addr %s473, 8
          %s475 = scalar_lea.vmem %s3, %s474
          // Predicated region
          $region67: #{conv_lstm_cell.1} parent=65 // pred_check
            _
          $region68: #{conv_lstm_cell.1} parent=65 // pred_check_branch
            %477 = sbr.rel (0) target = $region70
          $region69: #{conv_lstm_cell.1} parent=65 // pred_region
            // Predicated region
            $region71: #{conv_lstm_cell.1} parent=69 // pred_check
              _
            $region72: #{conv_lstm_cell.1} parent=69 // pred_check_branch
              %479 = sbr.rel (0) target = $region74
            $region73: #{conv_lstm_cell.1} parent=69 // pred_region
              loop: start=0, step=1, limit=1
              $region75: #{conv_lstm_cell.1} parent=73 // loop_pre_header
                _
              $region76: #{conv_lstm_cell.1} parent=73 // loop_header
                %s481 = sphi 0, %s485
                %p482 = scmp.ge.s32.totalorder %s481, 1
                %s486 = sphi %s475, %s475
                %s487 = sphi %s472, %s472
              $region77: #{conv_lstm_cell.1} parent=73 // loop_header_branch
                %484 = sbr.rel (%p482) target = $region81
              $region78: #{conv_lstm_cell.1} parent=73 // loop_body
                %v488 = vld [vmem:[%s486] sm:$0xff]
                %489 = vst [vmem:[%s487] sm:$0xff] %v488
                %v490 = vld [vmem:[%s486 + $0x8] sm:$0xff]
                %491 = vst [vmem:[%s487 + $0x8] sm:$0xff] %v490
                %v492 = vld [vmem:[%s486 + $0x20] sm:$0xff]
                %493 = vst [vmem:[%s487 + $0x10] sm:$0xff] %v492
                %v494 = vld [vmem:[%s486 + $0x28] sm:$0xff]
                %495 = vst [vmem:[%s487 + $0x18] sm:$0xff] %v494
                %v496 = vld [vmem:[%s486 + $0x40] sm:$0xff]
                %497 = vst [vmem:[%s487 + $0x20] sm:$0xff] %v496
                %v498 = vld [vmem:[%s486 + $0x48] sm:$0xff]
                %499 = vst [vmem:[%s487 + $0x28] sm:$0xff] %v498
                %v500 = vld [vmem:[%s486 + $0x60] sm:$0xff]
                %501 = vst [vmem:[%s487 + $0x30] sm:$0xff] %v500
                %v502 = vld [vmem:[%s486 + $0x68] sm:$0xff]
                %503 = vst [vmem:[%s487 + $0x38] sm:$0xff] %v502
              $region79: #{conv_lstm_cell.1} parent=73 // loop_footer
                %s485 = sadd.s32 1, %s481
              $region80: #{conv_lstm_cell.1} parent=73 // loop_footer_branch
                %480 = sbr.rel target = $region76
              $region81: #{conv_lstm_cell.1} parent=73 // loop_exit
                _
            $region74: #{conv_lstm_cell.1} parent=69 // pred_fallthru
              _
            // Predicated region
            $region82: #{conv_lstm_cell.1} parent=69 // pred_check
              _
            $region83: #{conv_lstm_cell.1} parent=69 // pred_check_branch
              %505 = sbr.rel target = $region85
            $region84: #{conv_lstm_cell.1} parent=69 // pred_region
              _
            $region85: #{conv_lstm_cell.1} parent=69 // pred_fallthru
              _
          $region70: #{conv_lstm_cell.1} parent=65 // pred_fallthru
            _
          %506 = vnop
        $region66: #{conv_lstm_cell.1} parent=23 // pred_fallthru
          _
        // Predicated region
        $region86: #{conv_lstm_cell.1} parent=23 // pred_check
          %p507 = pneg %p129
        $region87: #{conv_lstm_cell.1} parent=23 // pred_check_branch
          %509 = sbr.rel (%p507) target = $region89
        $region88: #{conv_lstm_cell.1} parent=23 // pred_region
          %s510 = sand.u32 %s119, 1
          %s511 = sand.u32 %s119, 1
          %s512 = smul.addr %s511, 64
          %s513 = scalar_lea.vmem [#allocation4], %s512
          %s514 = smul.u32 2, %s15
          %s515 = smul.addr %s514, 8
          %s516 = scalar_lea.vmem %s4, %s515
          // Predicated region
          $region90: #{conv_lstm_cell.1} parent=88 // pred_check
            _
          $region91: #{conv_lstm_cell.1} parent=88 // pred_check_branch
            %518 = sbr.rel (0) target = $region93
          $region92: #{conv_lstm_cell.1} parent=88 // pred_region
            // Predicated region
            $region94: #{conv_lstm_cell.1} parent=92 // pred_check
              _
            $region95: #{conv_lstm_cell.1} parent=92 // pred_check_branch
              %520 = sbr.rel (0) target = $region97
            $region96: #{conv_lstm_cell.1} parent=92 // pred_region
              loop: start=0, step=1, limit=1
              $region98: #{conv_lstm_cell.1} parent=96 // loop_pre_header
                _
              $region99: #{conv_lstm_cell.1} parent=96 // loop_header
                %s522 = sphi 0, %s526
                %p523 = scmp.ge.s32.totalorder %s522, 1
                %s527 = sphi %s516, %s516
                %s528 = sphi %s513, %s513
              $region100: #{conv_lstm_cell.1} parent=96 // loop_header_branch
                %525 = sbr.rel (%p523) target = $region104
              $region101: #{conv_lstm_cell.1} parent=96 // loop_body
                %v529 = vld [vmem:[%s527] sm:$0xff]
                %530 = vst [vmem:[%s528] sm:$0xff] %v529
                %v531 = vld [vmem:[%s527 + $0x8] sm:$0xff]
                %532 = vst [vmem:[%s528 + $0x8] sm:$0xff] %v531
                %v533 = vld [vmem:[%s527 + $0x20] sm:$0xff]
                %534 = vst [vmem:[%s528 + $0x10] sm:$0xff] %v533
                %v535 = vld [vmem:[%s527 + $0x28] sm:$0xff]
                %536 = vst [vmem:[%s528 + $0x18] sm:$0xff] %v535
                %v537 = vld [vmem:[%s527 + $0x40] sm:$0xff]
                %538 = vst [vmem:[%s528 + $0x20] sm:$0xff] %v537
                %v539 = vld [vmem:[%s527 + $0x48] sm:$0xff]
                %540 = vst [vmem:[%s528 + $0x28] sm:$0xff] %v539
                %v541 = vld [vmem:[%s527 + $0x60] sm:$0xff]
                %542 = vst [vmem:[%s528 + $0x30] sm:$0xff] %v541
                %v543 = vld [vmem:[%s527 + $0x68] sm:$0xff]
                %544 = vst [vmem:[%s528 + $0x38] sm:$0xff] %v543
              $region102: #{conv_lstm_cell.1} parent=96 // loop_footer
                %s526 = sadd.s32 1, %s522
              $region103: #{conv_lstm_cell.1} parent=96 // loop_footer_branch
                %521 = sbr.rel target = $region99
              $region104: #{conv_lstm_cell.1} parent=96 // loop_exit
                _
            $region97: #{conv_lstm_cell.1} parent=92 // pred_fallthru
              _
            // Predicated region
            $region105: #{conv_lstm_cell.1} parent=92 // pred_check
              _
            $region106: #{conv_lstm_cell.1} parent=92 // pred_check_branch
              %546 = sbr.rel target = $region108
            $region107: #{conv_lstm_cell.1} parent=92 // pred_region
              _
            $region108: #{conv_lstm_cell.1} parent=92 // pred_fallthru
              _
          $region93: #{conv_lstm_cell.1} parent=88 // pred_fallthru
            _
          %547 = vnop
        $region89: #{conv_lstm_cell.1} parent=23 // pred_fallthru
          _
        // Predicated region
        $region109: #{conv_lstm_cell.1} parent=23 // pred_check
          %p548 = pneg %p155
        $region110: #{conv_lstm_cell.1} parent=23 // pred_check_branch
          %550 = sbr.rel (%p548) target = $region112
        $region111: #{conv_lstm_cell.1} parent=23 // pred_region
          %s551 = sand.u32 %s145, 1
          %s552 = sand.u32 %s145, 1
          %s553 = smul.addr %s552, 64
          %s554 = scalar_lea.vmem [#allocation5], %s553
          %s555 = smul.u32 2, %s15
          %s556 = smul.addr %s555, 8
          %s557 = scalar_lea.vmem %s5, %s556
          // Predicated region
          $region113: #{conv_lstm_cell.1} parent=111 // pred_check
            _
          $region114: #{conv_lstm_cell.1} parent=111 // pred_check_branch
            %559 = sbr.rel (0) target = $region116
          $region115: #{conv_lstm_cell.1} parent=111 // pred_region
            // Predicated region
            $region117: #{conv_lstm_cell.1} parent=115 // pred_check
              _
            $region118: #{conv_lstm_cell.1} parent=115 // pred_check_branch
              %561 = sbr.rel (0) target = $region120
            $region119: #{conv_lstm_cell.1} parent=115 // pred_region
              loop: start=0, step=1, limit=1
              $region121: #{conv_lstm_cell.1} parent=119 // loop_pre_header
                _
              $region122: #{conv_lstm_cell.1} parent=119 // loop_header
                %s563 = sphi 0, %s567
                %p564 = scmp.ge.s32.totalorder %s563, 1
                %s568 = sphi %s557, %s557
                %s569 = sphi %s554, %s554
              $region123: #{conv_lstm_cell.1} parent=119 // loop_header_branch
                %566 = sbr.rel (%p564) target = $region127
              $region124: #{conv_lstm_cell.1} parent=119 // loop_body
                %v570 = vld [vmem:[%s568] sm:$0xff]
                %571 = vst [vmem:[%s569] sm:$0xff] %v570
                %v572 = vld [vmem:[%s568 + $0x8] sm:$0xff]
                %573 = vst [vmem:[%s569 + $0x8] sm:$0xff] %v572
                %v574 = vld [vmem:[%s568 + $0x20] sm:$0xff]
                %575 = vst [vmem:[%s569 + $0x10] sm:$0xff] %v574
                %v576 = vld [vmem:[%s568 + $0x28] sm:$0xff]
                %577 = vst [vmem:[%s569 + $0x18] sm:$0xff] %v576
                %v578 = vld [vmem:[%s568 + $0x40] sm:$0xff]
                %579 = vst [vmem:[%s569 + $0x20] sm:$0xff] %v578
                %v580 = vld [vmem:[%s568 + $0x48] sm:$0xff]
                %581 = vst [vmem:[%s569 + $0x28] sm:$0xff] %v580
                %v582 = vld [vmem:[%s568 + $0x60] sm:$0xff]
                %583 = vst [vmem:[%s569 + $0x30] sm:$0xff] %v582
                %v584 = vld [vmem:[%s568 + $0x68] sm:$0xff]
                %585 = vst [vmem:[%s569 + $0x38] sm:$0xff] %v584
              $region125: #{conv_lstm_cell.1} parent=119 // loop_footer
                %s567 = sadd.s32 1, %s563
              $region126: #{conv_lstm_cell.1} parent=119 // loop_footer_branch
                %562 = sbr.rel target = $region122
              $region127: #{conv_lstm_cell.1} parent=119 // loop_exit
                _
            $region120: #{conv_lstm_cell.1} parent=115 // pred_fallthru
              _
            // Predicated region
            $region128: #{conv_lstm_cell.1} parent=115 // pred_check
              _
            $region129: #{conv_lstm_cell.1} parent=115 // pred_check_branch
              %587 = sbr.rel target = $region131
            $region130: #{conv_lstm_cell.1} parent=115 // pred_region
              _
            $region131: #{conv_lstm_cell.1} parent=115 // pred_fallthru
              _
          $region116: #{conv_lstm_cell.1} parent=111 // pred_fallthru
            _
          %588 = vnop
        $region112: #{conv_lstm_cell.1} parent=23 // pred_fallthru
          _
        // Predicated region
        $region132: #{conv_lstm_cell.1} parent=23 // pred_check
          %p589 = pneg %p181
        $region133: #{conv_lstm_cell.1} parent=23 // pred_check_branch
          %591 = sbr.rel (%p589) target = $region135
        $region134: #{conv_lstm_cell.1} parent=23 // pred_region
          %s592 = sand.u32 %s171, 1
          %s593 = sand.u32 %s171, 1
          %s594 = smul.addr %s593, 64
          %s595 = scalar_lea.vmem [#allocation6], %s594
          %s596 = smul.u32 2, %s15
          %s597 = smul.addr %s596, 8
          %s598 = scalar_lea.vmem %s6, %s597
          // Predicated region
          $region136: #{conv_lstm_cell.1} parent=134 // pred_check
            _
          $region137: #{conv_lstm_cell.1} parent=134 // pred_check_branch
            %600 = sbr.rel (0) target = $region139
          $region138: #{conv_lstm_cell.1} parent=134 // pred_region
            // Predicated region
            $region140: #{conv_lstm_cell.1} parent=138 // pred_check
              _
            $region141: #{conv_lstm_cell.1} parent=138 // pred_check_branch
              %602 = sbr.rel (0) target = $region143
            $region142: #{conv_lstm_cell.1} parent=138 // pred_region
              loop: start=0, step=1, limit=1
              $region144: #{conv_lstm_cell.1} parent=142 // loop_pre_header
                _
              $region145: #{conv_lstm_cell.1} parent=142 // loop_header
                %s604 = sphi 0, %s608
                %p605 = scmp.ge.s32.totalorder %s604, 1
                %s609 = sphi %s598, %s598
                %s610 = sphi %s595, %s595
              $region146: #{conv_lstm_cell.1} parent=142 // loop_header_branch
                %607 = sbr.rel (%p605) target = $region150
              $region147: #{conv_lstm_cell.1} parent=142 // loop_body
                %v611 = vld [vmem:[%s609] sm:$0xff]
                %612 = vst [vmem:[%s610] sm:$0xff] %v611
                %v613 = vld [vmem:[%s609 + $0x8] sm:$0xff]
                %614 = vst [vmem:[%s610 + $0x8] sm:$0xff] %v613
                %v615 = vld [vmem:[%s609 + $0x20] sm:$0xff]
                %616 = vst [vmem:[%s610 + $0x10] sm:$0xff] %v615
                %v617 = vld [vmem:[%s609 + $0x28] sm:$0xff]
                %618 = vst [vmem:[%s610 + $0x18] sm:$0xff] %v617
                %v619 = vld [vmem:[%s609 + $0x40] sm:$0xff]
                %620 = vst [vmem:[%s610 + $0x20] sm:$0xff] %v619
                %v621 = vld [vmem:[%s609 + $0x48] sm:$0xff]
                %622 = vst [vmem:[%s610 + $0x28] sm:$0xff] %v621
                %v623 = vld [vmem:[%s609 + $0x60] sm:$0xff]
                %624 = vst [vmem:[%s610 + $0x30] sm:$0xff] %v623
                %v625 = vld [vmem:[%s609 + $0x68] sm:$0xff]
                %626 = vst [vmem:[%s610 + $0x38] sm:$0xff] %v625
              $region148: #{conv_lstm_cell.1} parent=142 // loop_footer
                %s608 = sadd.s32 1, %s604
              $region149: #{conv_lstm_cell.1} parent=142 // loop_footer_branch
                %603 = sbr.rel target = $region145
              $region150: #{conv_lstm_cell.1} parent=142 // loop_exit
                _
            $region143: #{conv_lstm_cell.1} parent=138 // pred_fallthru
              _
            // Predicated region
            $region151: #{conv_lstm_cell.1} parent=138 // pred_check
              _
            $region152: #{conv_lstm_cell.1} parent=138 // pred_check_branch
              %628 = sbr.rel target = $region154
            $region153: #{conv_lstm_cell.1} parent=138 // pred_region
              _
            $region154: #{conv_lstm_cell.1} parent=138 // pred_fallthru
              _
          $region139: #{conv_lstm_cell.1} parent=134 // pred_fallthru
            _
          %629 = vnop
        $region135: #{conv_lstm_cell.1} parent=23 // pred_fallthru
          _
      $region24: #{conv_lstm_cell.1} parent=5 // pred_fallthru
        _
      %p630 = scmp.le.s32.totalorder 1, %s15
      %p631 = scmp.lt.s32.totalorder %s15, 3
      %p632 = pnand %p630, %p631
      %p633 = pneg %p632
      // Predicated region
      $region155: #{conv_lstm_cell.1} parent=5 // pred_check
        _
      $region156: #{conv_lstm_cell.1} parent=5 // pred_check_branch
        %635 = sbr.rel (%p632) target = $region158
      $region157: #{conv_lstm_cell.1} parent=5 // pred_region
        %s636 = ssub.s32 %s15, 1
        %s637 = sand.u32 %s70, 1
        %s638 = sand.u32 %s70, 1
        %s639 = smul.addr %s638, 328
        %s640 = scalar_lea.vmem [#allocation2], %s639
        // Predicated region
        $region159: #{conv_lstm_cell.1} parent=157 // pred_check
          %p641 = pneg %p83
        $region160: #{conv_lstm_cell.1} parent=157 // pred_check_branch
          %643 = sbr.rel (%p641) target = $region162
        $region161: #{conv_lstm_cell.1} parent=157 // pred_region
          _
        $region162: #{conv_lstm_cell.1} parent=157 // pred_fallthru
          _
        %s644 = sand.u32 %s96, 1
        %s645 = sand.u32 %s96, 1
        %s646 = smul.addr %s645, 64
        %s647 = scalar_lea.vmem [#allocation3], %s646
        // Predicated region
        $region163: #{conv_lstm_cell.1} parent=157 // pred_check
          %p648 = pneg %p109
        $region164: #{conv_lstm_cell.1} parent=157 // pred_check_branch
          %650 = sbr.rel (%p648) target = $region166
        $region165: #{conv_lstm_cell.1} parent=157 // pred_region
          _
        $region166: #{conv_lstm_cell.1} parent=157 // pred_fallthru
          _
        %s651 = sand.u32 %s122, 1
        %s652 = sand.u32 %s122, 1
        %s653 = smul.addr %s652, 64
        %s654 = scalar_lea.vmem [#allocation4], %s653
        // Predicated region
        $region167: #{conv_lstm_cell.1} parent=157 // pred_check
          %p655 = pneg %p135
        $region168: #{conv_lstm_cell.1} parent=157 // pred_check_branch
          %657 = sbr.rel (%p655) target = $region170
        $region169: #{conv_lstm_cell.1} parent=157 // pred_region
          _
        $region170: #{conv_lstm_cell.1} parent=157 // pred_fallthru
          _
        %s658 = sand.u32 %s148, 1
        %s659 = sand.u32 %s148, 1
        %s660 = smul.addr %s659, 64
        %s661 = scalar_lea.vmem [#allocation5], %s660
        // Predicated region
        $region171: #{conv_lstm_cell.1} parent=157 // pred_check
          %p662 = pneg %p161
        $region172: #{conv_lstm_cell.1} parent=157 // pred_check_branch
          %664 = sbr.rel (%p662) target = $region174
        $region173: #{conv_lstm_cell.1} parent=157 // pred_region
          _
        $region174: #{conv_lstm_cell.1} parent=157 // pred_fallthru
          _
        %s665 = sand.u32 %s174, 1
        %s666 = sand.u32 %s174, 1
        %s667 = smul.addr %s666, 64
        %s668 = scalar_lea.vmem [#allocation6], %s667
        // Predicated region
        $region175: #{conv_lstm_cell.1} parent=157 // pred_check
          %p669 = pneg %p187
        $region176: #{conv_lstm_cell.1} parent=157 // pred_check_branch
          %671 = sbr.rel (%p669) target = $region178
        $region177: #{conv_lstm_cell.1} parent=157 // pred_region
          _
        $region178: #{conv_lstm_cell.1} parent=157 // pred_fallthru
          _
        %p672 = pneg %p36
        %p673 = pneg %p33
        %p674 = pneg %p57
        %p675 = pneg %p54
        %s676 = sand.u32 %s70, 1
        %s677 = sand.u32 %s70, 1
        %s678 = smul.addr %s677, 328
        %s679 = scalar_lea.vmem [#allocation2], %s678
        %p680 = pneg %p83
        %p681 = pneg %p80
        %s682 = sand.u32 %s96, 1
        %s683 = sand.u32 %s96, 1
        %s684 = smul.addr %s683, 64
        %s685 = scalar_lea.vmem [#allocation3], %s684
        %p686 = pneg %p109
        %p687 = pneg %p106
        %s688 = sand.u32 %s122, 1
        %s689 = sand.u32 %s122, 1
        %s690 = smul.addr %s689, 64
        %s691 = scalar_lea.vmem [#allocation4], %s690
        %p692 = pneg %p135
        %p693 = pneg %p132
        %s694 = sand.u32 %s148, 1
        %s695 = sand.u32 %s148, 1
        %s696 = smul.addr %s695, 64
        %s697 = scalar_lea.vmem [#allocation5], %s696
        %p698 = pneg %p161
        %p699 = pneg %p158
        %s700 = sand.u32 %s174, 1
        %s701 = sand.u32 %s174, 1
        %s702 = smul.addr %s701, 64
        %s703 = scalar_lea.vmem [#allocation6], %s702
        %p704 = pneg %p187
        %p705 = pneg %p184
        %p706 = pneg %p213
        %p707 = pneg %p210
        %s708 = sand.u32 %s200, 1
        %s709 = sand.u32 %s200, 1
        %s710 = smul.addr %s709, 64
        %s711 = scalar_lea.vmem [#allocation7], %s710
        %p712 = pneg %p239
        %p713 = pneg %p236
        %s714 = sand.u32 %s226, 1
        %s715 = sand.u32 %s226, 1
        %s716 = smul.addr %s715, 64
        %s717 = scalar_lea.vmem [#allocation8], %s716
        %s718 = smul.u32 2, %s20
        %s719 = smul.u32 2, %s20
        %s720 = smul.u32 2, %s20
        %s721 = smul.u32 2, %s20
        %s722 = smul.u32 2, %s20
        %s723 = smul.u32 2, %s20
        %s724 = smul.u32 2, %s20
        %v726 = vld [vmem:[%s0] sm:$0xff]
        %v727 = vld [vmem:[%s0 + $0x8] sm:$0xf]
        %v728 = vld [vmem:[%s0 + $0xc] sm:$0xff]
        %v729 = vld [vmem:[%s0 + $0x14] sm:$0xf]
        %v730 = vld [vmem:[%s0 + $0x18] sm:$0xff]
        %v731 = vld [vmem:[%s0 + $0x20] sm:$0xf]
        %v732 = vld [vmem:[%s0 + $0x24] sm:$0xff]
        %v733 = vld [vmem:[%s0 + $0x2c] sm:$0xf]
        %v734 = vld [vmem:[%s0 + $0x30] sm:$0xff]
        %v735 = vld [vmem:[%s0 + $0x38] sm:$0xf]
        %v736 = vld [vmem:[%s0 + $0x3c] sm:$0xff]
        %v737 = vld [vmem:[%s0 + $0x44] sm:$0xf]
        %v738 = vld [vmem:[%s0 + $0x48] sm:$0xff]
        %v739 = vld [vmem:[%s0 + $0x50] sm:$0xf]
        %v740 = vld [vmem:[%s0 + $0x54] sm:$0xff]
        %v741 = vld [vmem:[%s0 + $0x5c] sm:$0xf]
        %v742 = vld [vmem:[%s0 + $0x60] sm:$0xff]
        %v743 = vld [vmem:[%s0 + $0x68] sm:$0xf]
        %v744 = vld [vmem:[%s0 + $0x6c] sm:$0xff]
        %v745 = vld [vmem:[%s0 + $0x74] sm:$0xf]
        %v746 = vld [vmem:[%s0 + $0x78] sm:$0xff]
        %v747 = vld [vmem:[%s0 + $0x80] sm:$0xf]
        %v748 = vld [vmem:[%s0 + $0x84] sm:$0xff]
        %v749 = vld [vmem:[%s0 + $0x8c] sm:$0xf]
        %v750 = vld [vmem:[%s0 + $0x90] sm:$0xff]
        %v751 = vld [vmem:[%s0 + $0x98] sm:$0xf]
        %v752 = vld [vmem:[%s0 + $0x9c] sm:$0xff]
        %v753 = vld [vmem:[%s0 + $0xa4] sm:$0xf]
        %v754 = vld [vmem:[%s0 + $0xa8] sm:$0xff]
        %v755 = vld [vmem:[%s0 + $0xb0] sm:$0xf]
        %v756 = vld [vmem:[%s0 + $0xb4] sm:$0xff]
        %v757 = vld [vmem:[%s0 + $0xbc] sm:$0xf]
        %v758 = vld [vmem:[%s640] sm:$0xff]
        %v759 = vld [vmem:[%s640 + $0x8] sm:$0xff]
        %v760 = vld [vmem:[%s640 + $0x10] sm:$0xff]
        %v761 = vld [vmem:[%s640 + $0x18] sm:$0xff]
        %v762 = vld [vmem:[%s640 + $0x20] sm:$0xff]
        %v763 = vld [vmem:[%s640 + $0x28] sm:$0xff]
        %v764 = vld [vmem:[%s640 + $0x30] sm:$0xff]
        %v765 = vld [vmem:[%s640 + $0x38] sm:$0xff]
        %v766 = vld [vmem:[%s640 + $0x40] sm:$0xff]
        %v767 = vld [vmem:[%s640 + $0x48] sm:$0xff]
        %v768 = vld [vmem:[%s640 + $0x50] sm:$0xff]
        %v769 = vld [vmem:[%s640 + $0x58] sm:$0xff]
        %v770 = vld [vmem:[%s640 + $0x60] sm:$0xff]
        %v771 = vld [vmem:[%s640 + $0x68] sm:$0xff]
        %v772 = vld [vmem:[%s640 + $0x70] sm:$0xff]
        %v773 = vld [vmem:[%s640 + $0x78] sm:$0xff]
        %v774 = vld [vmem:[%s640 + $0x80] sm:$0xff]
        %v775 = vld [vmem:[%s640 + $0x88] sm:$0xff]
        %v776 = vld [vmem:[%s640 + $0x90] sm:$0xff]
        %v777 = vld [vmem:[%s640 + $0x98] sm:$0xff]
        %v778 = vld [vmem:[%s640 + $0xa0] sm:$0xff]
        %v779 = vld [vmem:[%s640 + $0xa8] sm:$0xff]
        %v780 = vld [vmem:[%s640 + $0xb0] sm:$0xff]
        %v781 = vld [vmem:[%s640 + $0xb8] sm:$0xff]
        %v782 = vld [vmem:[%s640 + $0xc0] sm:$0xff]
        %v783 = vld [vmem:[%s640 + $0xc8] sm:$0xff]
        %v784 = vld [vmem:[%s640 + $0xd0] sm:$0xff]
        %v785 = vld [vmem:[%s640 + $0xd8] sm:$0xff]
        %v786 = vld [vmem:[%s640 + $0xe0] sm:$0xff]
        %v787 = vld [vmem:[%s640 + $0xe8] sm:$0xff]
        %v788 = vld [vmem:[%s640 + $0xf0] sm:$0xff]
        %v789 = vld [vmem:[%s640 + $0xf8] sm:$0xff]
        %v790 = vld [vmem:[%s640 + $0x100] sm:$0xff]
        %v791 = vld [vmem:[%s640 + $0x108] sm:$0xff]
        %v792 = vld [vmem:[%s640 + $0x110] sm:$0xff]
        %v793 = vld [vmem:[%s640 + $0x118] sm:$0xff]
        %v794 = vld [vmem:[%s640 + $0x120] sm:$0xff]
        %v795 = vld [vmem:[%s640 + $0x128] sm:$0xff]
        %v796 = vld [vmem:[%s640 + $0x130] sm:$0xff]
        %v797 = vld [vmem:[%s640 + $0x138] sm:$0xff]
        %v798 = vld [vmem:[%s640 + $0x140] sm:$0x33]
        %v799 = vld [vmem:[%s1] sm:$0xff]
        %v800 = vld [vmem:[%s1 + $0x8] sm:$0xff]
        %v801 = vld [vmem:[%s1 + $0x10] sm:$0xff]
        %v802 = vld [vmem:[%s1 + $0x18] sm:$0xff]
        %v803 = vld [vmem:[%s1 + $0x20] sm:$0xff]
        %v804 = vld [vmem:[%s1 + $0x28] sm:$0xff]
        %v805 = vld [vmem:[%s1 + $0x30] sm:$0xff]
        %v806 = vld [vmem:[%s1 + $0x38] sm:$0xff]
        %v807 = vld [vmem:[%s1 + $0x40] sm:$0xff]
        %v808 = vld [vmem:[%s1 + $0x48] sm:$0xff]
        %v809 = vld [vmem:[%s1 + $0x50] sm:$0xff]
        %v810 = vld [vmem:[%s1 + $0x58] sm:$0xff]
        %v811 = vld [vmem:[%s1 + $0x60] sm:$0xff]
        %v812 = vld [vmem:[%s1 + $0x68] sm:$0xff]
        %v813 = vld [vmem:[%s1 + $0x70] sm:$0xff]
        %v814 = vld [vmem:[%s1 + $0x78] sm:$0xff]
        %816 = vset.pattern.permute.xlu0 0
        %817 = vperm.xlu0 %816, %v799
        %v818 = vpop.permute.xlu0 %817
        %821 = vset.pattern.permute.xlu0 0
        %822 = vperm.xlu0 %821, %v800
        %v823 = vpop.permute.xlu0 %822
        %826 = vset.pattern.permute.xlu0 0
        %827 = vperm.xlu0 %826, %v801
        %v828 = vpop.permute.xlu0 %827
        %831 = vset.pattern.permute.xlu0 0
        %832 = vperm.xlu0 %831, %v802
        %v833 = vpop.permute.xlu0 %832
        %836 = vset.pattern.permute.xlu0 0
        %837 = vperm.xlu0 %836, %v803
        %v838 = vpop.permute.xlu0 %837
        %841 = vset.pattern.permute.xlu0 0
        %842 = vperm.xlu0 %841, %v804
        %v843 = vpop.permute.xlu0 %842
        %846 = vset.pattern.permute.xlu0 0
        %847 = vperm.xlu0 %846, %v805
        %v848 = vpop.permute.xlu0 %847
        %851 = vset.pattern.permute.xlu0 0
        %852 = vperm.xlu0 %851, %v806
        %v853 = vpop.permute.xlu0 %852
        %856 = vset.pattern.permute.xlu0 0
        %857 = vperm.xlu0 %856, %v807
        %v858 = vpop.permute.xlu0 %857
        %861 = vset.pattern.permute.xlu0 0
        %862 = vperm.xlu0 %861, %v808
        %v863 = vpop.permute.xlu0 %862
        %866 = vset.pattern.permute.xlu0 0
        %867 = vperm.xlu0 %866, %v809
        %v868 = vpop.permute.xlu0 %867
        %871 = vset.pattern.permute.xlu0 0
        %872 = vperm.xlu0 %871, %v810
        %v873 = vpop.permute.xlu0 %872
        %876 = vset.pattern.permute.xlu0 0
        %877 = vperm.xlu0 %876, %v811
        %v878 = vpop.permute.xlu0 %877
        %881 = vset.pattern.permute.xlu0 0
        %882 = vperm.xlu0 %881, %v812
        %v883 = vpop.permute.xlu0 %882
        %886 = vset.pattern.permute.xlu0 0
        %887 = vperm.xlu0 %886, %v813
        %v888 = vpop.permute.xlu0 %887
        %891 = vset.pattern.permute.xlu0 0
        %892 = vperm.xlu0 %891, %v814
        %v893 = vpop.permute.xlu0 %892
        %v927 = vunpack.c.l.b16 %v726
        %v928 = vunpack.c.h.b16 %v726
        %v929 = vunpack.c.l.b16 %v727
        %v930 = vunpack.c.l.b16 %v728
        %v931 = vunpack.c.h.b16 %v728
        %v932 = vunpack.c.l.b16 %v729
        %v933 = vunpack.c.l.b16 %v730
        %v934 = vunpack.c.h.b16 %v730
        %v935 = vunpack.c.l.b16 %v731
        %v936 = vunpack.c.l.b16 %v732
        %v937 = vunpack.c.h.b16 %v732
        %v938 = vunpack.c.l.b16 %v733
        %v939 = vunpack.c.l.b16 %v734
        %v940 = vunpack.c.h.b16 %v734
        %v941 = vunpack.c.l.b16 %v735
        %v942 = vunpack.c.l.b16 %v736
        %v943 = vunpack.c.h.b16 %v736
        %v944 = vunpack.c.l.b16 %v737
        %v945 = vunpack.c.l.b16 %v738
        %v946 = vunpack.c.h.b16 %v738
        %v947 = vunpack.c.l.b16 %v739
        %v948 = vunpack.c.l.b16 %v740
        %v949 = vunpack.c.h.b16 %v740
        %v950 = vunpack.c.l.b16 %v741
        %v951 = vunpack.c.l.b16 %v742
        %v952 = vunpack.c.h.b16 %v742
        %v953 = vunpack.c.l.b16 %v743
        %v954 = vunpack.c.l.b16 %v744
        %v955 = vunpack.c.h.b16 %v744
        %v956 = vunpack.c.l.b16 %v745
        %v957 = vunpack.c.l.b16 %v746
        %v958 = vunpack.c.h.b16 %v746
        %v959 = vunpack.c.l.b16 %v747
        %v960 = vunpack.c.l.b16 %v748
        %v961 = vunpack.c.h.b16 %v748
        %v962 = vunpack.c.l.b16 %v749
        %v963 = vunpack.c.l.b16 %v750
        %v964 = vunpack.c.h.b16 %v750
        %v965 = vunpack.c.l.b16 %v751
        %v966 = vunpack.c.l.b16 %v752
        %v967 = vunpack.c.h.b16 %v752
        %v968 = vunpack.c.l.b16 %v753
        %v969 = vunpack.c.l.b16 %v754
        %v970 = vunpack.c.h.b16 %v754
        %v971 = vunpack.c.l.b16 %v755
        %v972 = vunpack.c.l.b16 %v756
        %v973 = vunpack.c.h.b16 %v756
        %v974 = vunpack.c.l.b16 %v757
        %v975 = vpack.c.b16 %v930, %v927
        %v976 = vpack.c.b16 %v931, %v928
        %v977 = vpack.c.b16 %v932, %v929
        %v978 = vpack.c.b16 %v936, %v933
        %v979 = vpack.c.b16 %v937, %v934
        %v980 = vpack.c.b16 %v938, %v935
        %v981 = vpack.c.b16 %v942, %v939
        %v982 = vpack.c.b16 %v943, %v940
        %v983 = vpack.c.b16 %v944, %v941
        %v984 = vpack.c.b16 %v948, %v945
        %v985 = vpack.c.b16 %v949, %v946
        %v986 = vpack.c.b16 %v950, %v947
        %v987 = vpack.c.b16 %v954, %v951
        %v988 = vpack.c.b16 %v955, %v952
        %v989 = vpack.c.b16 %v956, %v953
        %v990 = vpack.c.b16 %v960, %v957
        %v991 = vpack.c.b16 %v961, %v958
        %v992 = vpack.c.b16 %v962, %v959
        %v993 = vpack.c.b16 %v966, %v963
        %v994 = vpack.c.b16 %v967, %v964
        %v995 = vpack.c.b16 %v968, %v965
        %v996 = vpack.c.b16 %v972, %v969
        %v997 = vpack.c.b16 %v973, %v970
        %v998 = vpack.c.b16 %v974, %v971
        %v1056 = vunpack.c.l.b16 %v758
        %v1057 = vunpack.c.h.b16 %v758
        %v1058 = vunpack.c.l.b16 %v759
        %v1059 = vunpack.c.h.b16 %v759
        %v1060 = vunpack.c.l.b16 %v760
        %v1061 = vunpack.c.h.b16 %v760
        %v1062 = vunpack.c.l.b16 %v761
        %v1063 = vunpack.c.h.b16 %v761
        %v1064 = vunpack.c.l.b16 %v762
        %v1065 = vunpack.c.h.b16 %v762
        %v1066 = vunpack.c.l.b16 %v763
        %v1067 = vunpack.c.h.b16 %v763
        %v1068 = vunpack.c.l.b16 %v764
        %v1069 = vunpack.c.h.b16 %v764
        %v1070 = vunpack.c.l.b16 %v765
        %v1071 = vunpack.c.h.b16 %v765
        %v1072 = vunpack.c.l.b16 %v766
        %v1073 = vunpack.c.h.b16 %v766
        %v1074 = vunpack.c.l.b16 %v767
        %v1075 = vunpack.c.h.b16 %v767
        %v1076 = vunpack.c.l.b16 %v768
        %v1077 = vunpack.c.h.b16 %v768
        %v1078 = vunpack.c.l.b16 %v769
        %v1079 = vunpack.c.h.b16 %v769
        %v1080 = vunpack.c.l.b16 %v770
        %v1081 = vunpack.c.h.b16 %v770
        %v1082 = vunpack.c.l.b16 %v771
        %v1083 = vunpack.c.h.b16 %v771
        %v1084 = vunpack.c.l.b16 %v772
        %v1085 = vunpack.c.h.b16 %v772
        %v1086 = vunpack.c.l.b16 %v773
        %v1087 = vunpack.c.h.b16 %v773
        %v1088 = vunpack.c.l.b16 %v774
        %v1089 = vunpack.c.h.b16 %v774
        %v1090 = vunpack.c.l.b16 %v775
        %v1091 = vunpack.c.h.b16 %v775
        %v1092 = vunpack.c.l.b16 %v776
        %v1093 = vunpack.c.h.b16 %v776
        %v1094 = vunpack.c.l.b16 %v777
        %v1095 = vunpack.c.h.b16 %v777
        %v1096 = vunpack.c.l.b16 %v778
        %v1097 = vunpack.c.h.b16 %v778
        %v1098 = vunpack.c.l.b16 %v779
        %v1099 = vunpack.c.h.b16 %v779
        %v1100 = vunpack.c.l.b16 %v780
        %v1101 = vunpack.c.h.b16 %v780
        %v1102 = vunpack.c.l.b16 %v781
        %v1103 = vunpack.c.h.b16 %v781
        %v1104 = vunpack.c.l.b16 %v782
        %v1105 = vunpack.c.h.b16 %v782
        %v1106 = vunpack.c.l.b16 %v783
        %v1107 = vunpack.c.h.b16 %v783
        %v1108 = vunpack.c.l.b16 %v784
        %v1109 = vunpack.c.h.b16 %v784
        %v1110 = vunpack.c.l.b16 %v785
        %v1111 = vunpack.c.h.b16 %v785
        %v1112 = vunpack.c.l.b16 %v786
        %v1113 = vunpack.c.h.b16 %v786
        %v1114 = vunpack.c.l.b16 %v787
        %v1115 = vunpack.c.h.b16 %v787
        %v1116 = vunpack.c.l.b16 %v788
        %v1117 = vunpack.c.h.b16 %v788
        %v1118 = vunpack.c.l.b16 %v789
        %v1119 = vunpack.c.h.b16 %v789
        %v1120 = vunpack.c.l.b16 %v790
        %v1121 = vunpack.c.h.b16 %v790
        %v1122 = vunpack.c.l.b16 %v791
        %v1123 = vunpack.c.h.b16 %v791
        %v1124 = vunpack.c.l.b16 %v792
        %v1125 = vunpack.c.h.b16 %v792
        %v1126 = vunpack.c.l.b16 %v793
        %v1127 = vunpack.c.h.b16 %v793
        %v1128 = vunpack.c.l.b16 %v794
        %v1129 = vunpack.c.h.b16 %v794
        %v1130 = vunpack.c.l.b16 %v795
        %v1131 = vunpack.c.h.b16 %v795
        %v1132 = vunpack.c.l.b16 %v796
        %v1133 = vunpack.c.h.b16 %v796
        %v1134 = vunpack.c.l.b16 %v797
        %v1135 = vunpack.c.h.b16 %v797
        %v1136 = vunpack.c.l.b16 %v798
        %v1137 = vunpack.c.h.b16 %v798
        %v1138 = vpack.c.b16 %v1058, %v1056
        %v1139 = vpack.c.b16 %v1059, %v1057
        %v1140 = vpack.c.b16 %v1062, %v1060
        %v1141 = vpack.c.b16 %v1063, %v1061
        %v1142 = vpack.c.b16 %v1066, %v1064
        %v1143 = vpack.c.b16 %v1067, %v1065
        %v1144 = vpack.c.b16 %v1070, %v1068
        %v1145 = vpack.c.b16 %v1071, %v1069
        %v1146 = vpack.c.b16 %v1074, %v1072
        %v1147 = vpack.c.b16 %v1075, %v1073
        %v1148 = vpack.c.b16 %v1078, %v1076
        %v1149 = vpack.c.b16 %v1079, %v1077
        %v1150 = vpack.c.b16 %v1082, %v1080
        %v1151 = vpack.c.b16 %v1083, %v1081
        %v1152 = vpack.c.b16 %v1086, %v1084
        %v1153 = vpack.c.b16 %v1087, %v1085
        %v1154 = vpack.c.b16 %v1090, %v1088
        %v1155 = vpack.c.b16 %v1091, %v1089
        %v1156 = vpack.c.b16 %v1094, %v1092
        %v1157 = vpack.c.b16 %v1095, %v1093
        %v1158 = vpack.c.b16 %v1098, %v1096
        %v1159 = vpack.c.b16 %v1099, %v1097
        %v1160 = vpack.c.b16 %v1102, %v1100
        %v1161 = vpack.c.b16 %v1103, %v1101
        %v1162 = vpack.c.b16 %v1106, %v1104
        %v1163 = vpack.c.b16 %v1107, %v1105
        %v1164 = vpack.c.b16 %v1110, %v1108
        %v1165 = vpack.c.b16 %v1111, %v1109
        %v1166 = vpack.c.b16 %v1114, %v1112
        %v1167 = vpack.c.b16 %v1115, %v1113
        %v1168 = vpack.c.b16 %v1118, %v1116
        %v1169 = vpack.c.b16 %v1119, %v1117
        %v1170 = vpack.c.b16 %v1122, %v1120
        %v1171 = vpack.c.b16 %v1123, %v1121
        %v1172 = vpack.c.b16 %v1126, %v1124
        %v1173 = vpack.c.b16 %v1127, %v1125
        %v1174 = vpack.c.b16 %v1130, %v1128
        %v1175 = vpack.c.b16 %v1131, %v1129
        %v1176 = vpack.c.b16 %v1134, %v1132
        %v1177 = vpack.c.b16 %v1135, %v1133
        %v1178 = vpack.c.b16 %v1136, %v1136
        %v1179 = vpack.c.b16 %v1137, %v1137
        %vm1220 = vcmask 556032
        %v1222 = vsel %vm1220, %v977, 0
        %v1225 = vsel %vm1220, %v980, 0
        %v1228 = vsel %vm1220, %v983, 0
        %v1231 = vsel %vm1220, %v986, 0
        %v1234 = vsel %vm1220, %v989, 0
        %v1237 = vsel %vm1220, %v992, 0
        %v1240 = vsel %vm1220, %v995, 0
        %v1243 = vsel %vm1220, %v998, 0
        %vm1245 = vcmask 1041408
        %v1247 = vsel %vm1245, %v1178, 0
        %v1250 = vsel %vm1245, %v1179, 0
        %1252 = vmatprep.subr.bf16.mxu0 %v1139
        %1253 = vmatpush1.bf16.msra.mxu0 %v1138
        %1254 = vmatprep.subr.bf16.mxu0 %v1141
        %1255 = vmatpush1.bf16.msra.mxu0 %v1140
        %1256 = vmatprep.subr.bf16.mxu0 %v1143
        %1257 = vmatpush1.bf16.msra.mxu0 %v1142
        %1258 = vmatprep.subr.bf16.mxu0 %v1145
        %1259 = vmatpush1.bf16.msra.mxu0 %v1144
        %1260 = vmatprep.subr.bf16.mxu0 %v1147
        %1261 = vmatpush1.bf16.msra.mxu0 %v1146
        %1262 = vmatprep.subr.bf16.mxu0 %v1149
        %1263 = vmatpush1.bf16.msra.mxu0 %v1148
        %1264 = vmatprep.subr.bf16.mxu0 %v1151
        %1265 = vmatpush1.bf16.msra.mxu0 %v1150
        %1266 = vmatprep.subr.bf16.mxu0 %v1153
        %1267 = vmatpush1.bf16.msra.mxu0 %v1152
        %1268 = vmatprep.subr.bf16.mxu0 %v1155
        %1269 = vmatpush1.bf16.msra.mxu0 %v1154
        %1270 = vmatprep.subr.bf16.mxu0 %v1157
        %1271 = vmatpush1.bf16.msra.mxu0 %v1156
        %1272 = vmatprep.subr.bf16.mxu0 %v1159
        %1273 = vmatpush1.bf16.msra.mxu0 %v1158
        %1274 = vmatprep.subr.bf16.mxu0 %v1161
        %1275 = vmatpush1.bf16.msra.mxu0 %v1160
        %1276 = vmatprep.subr.bf16.mxu0 %v1163
        %1277 = vmatpush1.bf16.msra.mxu0 %v1162
        %1278 = vmatprep.subr.bf16.mxu0 %v1165
        %1279 = vmatpush1.bf16.msra.mxu0 %v1164
        %1280 = vmatprep.subr.bf16.mxu0 %v1167
        %1281 = vmatpush1.bf16.msra.mxu0 %v1166
        %1282 = vmatprep.subr.bf16.mxu0 %v1169
        %1283 = vmatpush1.bf16.msra.mxu0 %v1168
        %1284 = vmatprep.mubr.bf16.mxu0 %v976
        %1285 = vmatmul.mubr.bf16.gmra.mrb[0].mxu0 %v975
        %v1286 = vpop.f32.mrb[0].mxu0
        %v1287 = vadd.f32 %v818, %v1286
        %v1288 = vpop.f32.mrb[0].mxu0
        %v1289 = vadd.f32 %v818, %v1288
        %v1290 = vpop.f32.mrb[0].mxu0
        %v1291 = vadd.f32 %v823, %v1290
        %v1292 = vpop.f32.mrb[0].mxu0
        %v1293 = vadd.f32 %v823, %v1292
        %1294 = vmatprep.mubr.bf16.mxu0 %v979
        %1295 = vmatmul.mubr.bf16.gmra.mrb[0].mxu0 %v978
        %v1296 = vpop.f32.mrb[0].mxu0
        %v1297 = vadd.f32 %v828, %v1296
        %v1298 = vpop.f32.mrb[0].mxu0
        %v1299 = vadd.f32 %v828, %v1298
        %v1300 = vpop.f32.mrb[0].mxu0
        %v1301 = vadd.f32 %v833, %v1300
        %v1302 = vpop.f32.mrb[0].mxu0
        %v1303 = vadd.f32 %v833, %v1302
        %1304 = vmatprep.mubr.bf16.mxu0 %v982
        %1305 = vmatmul.mubr.bf16.gmra.mrb[0].mxu0 %v981
        %v1306 = vpop.f32.mrb[0].mxu0
        %v1307 = vadd.f32 %v838, %v1306
        %v1308 = vpop.f32.mrb[0].mxu0
        %v1309 = vadd.f32 %v838, %v1308
        %v1310 = vpop.f32.mrb[0].mxu0
        %v1311 = vadd.f32 %v843, %v1310
        %v1312 = vpop.f32.mrb[0].mxu0
        %v1313 = vadd.f32 %v843, %v1312
        %1314 = vmatprep.mubr.bf16.mxu0 %v985
        %1315 = vmatmul.mubr.bf16.gmra.mrb[0].mxu0 %v984
        %v1316 = vpop.f32.mrb[0].mxu0
        %v1317 = vadd.f32 %v848, %v1316
        %v1318 = vpop.f32.mrb[0].mxu0
        %v1319 = vadd.f32 %v848, %v1318
        %v1320 = vpop.f32.mrb[0].mxu0
        %v1321 = vadd.f32 %v853, %v1320
        %v1322 = vpop.f32.mrb[0].mxu0
        %v1323 = vadd.f32 %v853, %v1322
        %1324 = vmatprep.mubr.bf16.mxu0 %v988
        %1325 = vmatmul.mubr.bf16.gmra.mrb[0].mxu0 %v987
        %v1326 = vpop.f32.mrb[0].mxu0
        %v1327 = vadd.f32 %v858, %v1326
        %v1328 = vpop.f32.mrb[0].mxu0
        %v1329 = vadd.f32 %v858, %v1328
        %v1330 = vpop.f32.mrb[0].mxu0
        %v1331 = vadd.f32 %v863, %v1330
        %v1332 = vpop.f32.mrb[0].mxu0
        %v1333 = vadd.f32 %v863, %v1332
        %1334 = vmatprep.mubr.bf16.mxu0 %v991
        %1335 = vmatmul.mubr.bf16.gmra.mrb[0].mxu0 %v990
        %v1336 = vpop.f32.mrb[0].mxu0
        %v1337 = vadd.f32 %v868, %v1336
        %v1338 = vpop.f32.mrb[0].mxu0
        %v1339 = vadd.f32 %v868, %v1338
        %v1340 = vpop.f32.mrb[0].mxu0
        %v1341 = vadd.f32 %v873, %v1340
        %v1342 = vpop.f32.mrb[0].mxu0
        %v1343 = vadd.f32 %v873, %v1342
        %1344 = vmatprep.mubr.bf16.mxu0 %v994
        %1345 = vmatmul.mubr.bf16.gmra.mrb[0].mxu0 %v993
        %v1346 = vpop.f32.mrb[0].mxu0
        %v1347 = vadd.f32 %v878, %v1346
        %v1348 = vpop.f32.mrb[0].mxu0
        %v1349 = vadd.f32 %v878, %v1348
        %v1350 = vpop.f32.mrb[0].mxu0
        %v1351 = vadd.f32 %v883, %v1350
        %v1352 = vpop.f32.mrb[0].mxu0
        %v1353 = vadd.f32 %v883, %v1352
        %1354 = vmatprep.mubr.bf16.mxu0 %v997
        %1355 = vmatmul.mubr.bf16.gmra.mrb[0].mxu0 %v996
        %v1356 = vpop.f32.mrb[0].mxu0
        %v1357 = vadd.f32 %v888, %v1356
        %v1358 = vpop.f32.mrb[0].mxu0
        %v1359 = vadd.f32 %v888, %v1358
        %v1360 = vpop.f32.mrb[0].mxu0
        %v1361 = vadd.f32 %v893, %v1360
        %v1362 = vpop.f32.mrb[0].mxu0
        %v1363 = vadd.f32 %v893, %v1362
        %1364 = vdwg.mxu0
        %1365 = vmatprep.subr.bf16.mxu0 %v1171
        %1366 = vmatpush1.bf16.msra.mxu0 %v1170
        %1367 = vmatprep.subr.bf16.mxu0 %v1173
        %1368 = vmatpush1.bf16.msra.mxu0 %v1172
        %1369 = vmatprep.subr.bf16.mxu0 %v1175
        %1370 = vmatpush1.bf16.msra.mxu0 %v1174
        %1371 = vmatprep.subr.bf16.mxu0 %v1177
        %1372 = vmatpush1.bf16.msra.mxu0 %v1176
        %1373 = vmatprep.subr.bf16.mxu0 %v1250
        %1374 = vmatpush1.bf16.msra.mxu0 %v1247
        %1375 = vmatprep.subr.bf16.mxu0 0
        %1376 = vmatpush1.bf16.msra.mxu0 0
        %1377 = vmatprep.subr.bf16.mxu0 0
        %1378 = vmatpush1.bf16.msra.mxu0 0
        %1379 = vmatprep.subr.bf16.mxu0 0
        %1380 = vmatpush1.bf16.msra.mxu0 0
        %1381 = vmatprep.subr.bf16.mxu0 0
        %1382 = vmatpush1.bf16.msra.mxu0 0
        %1383 = vmatprep.subr.bf16.mxu0 0
        %1384 = vmatpush1.bf16.msra.mxu0 0
        %1385 = vmatprep.subr.bf16.mxu0 0
        %1386 = vmatpush1.bf16.msra.mxu0 0
        %1387 = vmatprep.subr.bf16.mxu0 0
        %1388 = vmatpush1.bf16.msra.mxu0 0
        %1389 = vmatprep.subr.bf16.mxu0 0
        %1390 = vmatpush1.bf16.msra.mxu0 0
        %1391 = vmatprep.subr.bf16.mxu0 0
        %1392 = vmatpush1.bf16.msra.mxu0 0
        %1393 = vmatprep.subr.bf16.mxu0 0
        %1394 = vmatpush1.bf16.msra.mxu0 0
        %1395 = vmatprep.subr.bf16.mxu0 0
        %1396 = vmatpush1.bf16.msra.mxu0 0
        %1397 = vmatprep.mubr.bf16.mxu0 0
        %1398 = vmatmul.mubr.bf16.gmra.mrb[0].mxu0 %v1222
        %v1399 = vpop.f32.mrb[0].mxu0
        %v1400 = vadd.f32 %v1287, %v1399
        %v1401 = vpop.f32.mrb[0].mxu0
        %v1402 = vadd.f32 %v1289, %v1401
        %v1403 = vpop.f32.mrb[0].mxu0
        %v1404 = vadd.f32 %v1291, %v1403
        %v1405 = vpop.f32.mrb[0].mxu0
        %v1406 = vadd.f32 %v1293, %v1405
        %1407 = vmatprep.mubr.bf16.mxu0 0
        %1408 = vmatmul.mubr.bf16.gmra.mrb[0].mxu0 %v1225
        %v1409 = vpop.f32.mrb[0].mxu0
        %v1410 = vadd.f32 %v1297, %v1409
        %v1411 = vpop.f32.mrb[0].mxu0
        %v1412 = vadd.f32 %v1299, %v1411
        %v1413 = vpop.f32.mrb[0].mxu0
        %v1414 = vadd.f32 %v1301, %v1413
        %v1415 = vpop.f32.mrb[0].mxu0
        %v1416 = vadd.f32 %v1303, %v1415
        %1417 = vmatprep.mubr.bf16.mxu0 0
        %1418 = vmatmul.mubr.bf16.gmra.mrb[0].mxu0 %v1228
        %v1419 = vpop.f32.mrb[0].mxu0
        %v1420 = vadd.f32 %v1307, %v1419
        %v1421 = vpop.f32.mrb[0].mxu0
        %v1422 = vadd.f32 %v1309, %v1421
        %v1423 = vpop.f32.mrb[0].mxu0
        %v1424 = vadd.f32 %v1311, %v1423
        %v1425 = vpop.f32.mrb[0].mxu0
        %v1426 = vadd.f32 %v1313, %v1425
        %1427 = vmatprep.mubr.bf16.mxu0 0
        %1428 = vmatmul.mubr.bf16.gmra.mrb[0].mxu0 %v1231
        %v1429 = vpop.f32.mrb[0].mxu0
        %v1430 = vadd.f32 %v1317, %v1429
        %v1431 = vpop.f32.mrb[0].mxu0
        %v1432 = vadd.f32 %v1319, %v1431
        %v1433 = vpop.f32.mrb[0].mxu0
        %v1434 = vadd.f32 %v1321, %v1433
        %v1435 = vpop.f32.mrb[0].mxu0
        %v1436 = vadd.f32 %v1323, %v1435
        %1437 = vmatprep.mubr.bf16.mxu0 0
        %1438 = vmatmul.mubr.bf16.gmra.mrb[0].mxu0 %v1234
        %v1439 = vpop.f32.mrb[0].mxu0
        %v1440 = vadd.f32 %v1327, %v1439
        %v1441 = vpop.f32.mrb[0].mxu0
        %v1442 = vadd.f32 %v1329, %v1441
        %v1443 = vpop.f32.mrb[0].mxu0
        %v1444 = vadd.f32 %v1331, %v1443
        %v1445 = vpop.f32.mrb[0].mxu0
        %v1446 = vadd.f32 %v1333, %v1445
        %1447 = vmatprep.mubr.bf16.mxu0 0
        %1448 = vmatmul.mubr.bf16.gmra.mrb[0].mxu0 %v1237
        %v1449 = vpop.f32.mrb[0].mxu0
        %v1450 = vadd.f32 %v1337, %v1449
        %v1451 = vpop.f32.mrb[0].mxu0
        %v1452 = vadd.f32 %v1339, %v1451
        %v1453 = vpop.f32.mrb[0].mxu0
        %v1454 = vadd.f32 %v1341, %v1453
        %v1455 = vpop.f32.mrb[0].mxu0
        %v1456 = vadd.f32 %v1343, %v1455
        %1457 = vmatprep.mubr.bf16.mxu0 0
        %1458 = vmatmul.mubr.bf16.gmra.mrb[0].mxu0 %v1240
        %v1459 = vpop.f32.mrb[0].mxu0
        %v1460 = vadd.f32 %v1347, %v1459
        %v1461 = vpop.f32.mrb[0].mxu0
        %v1462 = vadd.f32 %v1349, %v1461
        %v1463 = vpop.f32.mrb[0].mxu0
        %v1464 = vadd.f32 %v1351, %v1463
        %v1465 = vpop.f32.mrb[0].mxu0
        %v1466 = vadd.f32 %v1353, %v1465
        %1467 = vmatprep.mubr.bf16.mxu0 0
        %1468 = vmatmul.mubr.bf16.gmra.mrb[0].mxu0 %v1243
        %v1469 = vpop.f32.mrb[0].mxu0
        %v1470 = vadd.f32 %v1357, %v1469
        %v1471 = vpop.f32.mrb[0].mxu0
        %v1472 = vadd.f32 %v1359, %v1471
        %v1473 = vpop.f32.mrb[0].mxu0
        %v1474 = vadd.f32 %v1361, %v1473
        %v1475 = vpop.f32.mrb[0].mxu0
        %v1476 = vadd.f32 %v1363, %v1475
        %1477 = vdwg.mxu0
        %v1478 = vld [vmem:[%s647] sm:$0xff]
        %v1479 = vld [vmem:[%s647 + $0x8] sm:$0xff]
        %v1480 = vld [vmem:[%s647 + $0x10] sm:$0xff]
        %v1481 = vld [vmem:[%s647 + $0x18] sm:$0xff]
        %v1482 = vld [vmem:[%s647 + $0x20] sm:$0xff]
        %v1483 = vld [vmem:[%s647 + $0x28] sm:$0xff]
        %v1484 = vld [vmem:[%s647 + $0x30] sm:$0xff]
        %v1485 = vld [vmem:[%s647 + $0x38] sm:$0xff]
        %v1486 = vld [vmem:[%s654] sm:$0xff]
        %v1487 = vld [vmem:[%s654 + $0x8] sm:$0xff]
        %v1488 = vld [vmem:[%s654 + $0x10] sm:$0xff]
        %v1489 = vld [vmem:[%s654 + $0x18] sm:$0xff]
        %v1490 = vld [vmem:[%s654 + $0x20] sm:$0xff]
        %v1491 = vld [vmem:[%s654 + $0x28] sm:$0xff]
        %v1492 = vld [vmem:[%s654 + $0x30] sm:$0xff]
        %v1493 = vld [vmem:[%s654 + $0x38] sm:$0xff]
        %v1494 = vmul.f32 %v1478, %v1486
        %v1495 = vmul.f32 %v1479, %v1487
        %v1496 = vmul.f32 %v1480, %v1488
        %v1497 = vmul.f32 %v1481, %v1489
        %v1498 = vmul.f32 %v1482, %v1490
        %v1499 = vmul.f32 %v1483, %v1491
        %v1500 = vmul.f32 %v1484, %v1492
        %v1501 = vmul.f32 %v1485, %v1493
        %v1502 = vadd.f32 %v1400, %v1494
        %v1503 = vadd.f32 %v1402, %v1495
        %v1504 = vadd.f32 %v1404, %v1496
        %v1505 = vadd.f32 %v1406, %v1497
        %v1506 = vadd.f32 %v1410, %v1498
        %v1507 = vadd.f32 %v1412, %v1499
        %v1508 = vadd.f32 %v1414, %v1500
        %v1509 = vadd.f32 %v1416, %v1501
        %v1510 = vxor.u32 %v1502, 2147483648
        %v1511 = vxor.u32 %v1503, 2147483648
        %v1512 = vxor.u32 %v1504, 2147483648
        %v1513 = vxor.u32 %v1505, 2147483648
        %v1514 = vxor.u32 %v1506, 2147483648
        %v1515 = vxor.u32 %v1507, 2147483648
        %v1516 = vxor.u32 %v1508, 2147483648
        %v1517 = vxor.u32 %v1509, 2147483648
        %v1518 = vmul.f32 %v1510, 1.442695
        %v1519 = vpow.pop %v1518
        %v1520 = vmul.f32 %v1511, 1.442695
        %v1521 = vpow.pop %v1520
        %v1522 = vmul.f32 %v1512, 1.442695
        %v1523 = vpow.pop %v1522
        %v1524 = vmul.f32 %v1513, 1.442695
        %v1525 = vpow.pop %v1524
        %v1526 = vmul.f32 %v1514, 1.442695
        %v1527 = vpow.pop %v1526
        %v1528 = vmul.f32 %v1515, 1.442695
        %v1529 = vpow.pop %v1528
        %v1530 = vmul.f32 %v1516, 1.442695
        %v1531 = vpow.pop %v1530
        %v1532 = vmul.f32 %v1517, 1.442695
        %v1533 = vpow.pop %v1532
        %v1534 = vadd.f32 %v1519, 1.0
        %v1535 = vadd.f32 %v1521, 1.0
        %v1536 = vadd.f32 %v1523, 1.0
        %v1537 = vadd.f32 %v1525, 1.0
        %v1538 = vadd.f32 %v1527, 1.0
        %v1539 = vadd.f32 %v1529, 1.0
        %v1540 = vadd.f32 %v1531, 1.0
        %v1541 = vadd.f32 %v1533, 1.0
        %v1542 = vrcp.pop %v1534
        %v1543 = vmul.f32 1.0, %v1542
        %v1544 = vrcp.pop %v1535
        %v1545 = vmul.f32 1.0, %v1544
        %v1546 = vrcp.pop %v1536
        %v1547 = vmul.f32 1.0, %v1546
        %v1548 = vrcp.pop %v1537
        %v1549 = vmul.f32 1.0, %v1548
        %v1550 = vrcp.pop %v1538
        %v1551 = vmul.f32 1.0, %v1550
        %v1552 = vrcp.pop %v1539
        %v1553 = vmul.f32 1.0, %v1552
        %v1554 = vrcp.pop %v1540
        %v1555 = vmul.f32 1.0, %v1554
        %v1556 = vrcp.pop %v1541
        %v1557 = vmul.f32 1.0, %v1556
        %v1558 = vld [vmem:[%s661] sm:$0xff]
        %v1559 = vld [vmem:[%s661 + $0x8] sm:$0xff]
        %v1560 = vld [vmem:[%s661 + $0x10] sm:$0xff]
        %v1561 = vld [vmem:[%s661 + $0x18] sm:$0xff]
        %v1562 = vld [vmem:[%s661 + $0x20] sm:$0xff]
        %v1563 = vld [vmem:[%s661 + $0x28] sm:$0xff]
        %v1564 = vld [vmem:[%s661 + $0x30] sm:$0xff]
        %v1565 = vld [vmem:[%s661 + $0x38] sm:$0xff]
        %v1566 = vmul.f32 %v1478, %v1558
        %v1567 = vmul.f32 %v1479, %v1559
        %v1568 = vmul.f32 %v1480, %v1560
        %v1569 = vmul.f32 %v1481, %v1561
        %v1570 = vmul.f32 %v1482, %v1562
        %v1571 = vmul.f32 %v1483, %v1563
        %v1572 = vmul.f32 %v1484, %v1564
        %v1573 = vmul.f32 %v1485, %v1565
        %v1574 = vadd.f32 %v1420, %v1566
        %v1575 = vadd.f32 %v1422, %v1567
        %v1576 = vadd.f32 %v1424, %v1568
        %v1577 = vadd.f32 %v1426, %v1569
        %v1578 = vadd.f32 %v1430, %v1570
        %v1579 = vadd.f32 %v1432, %v1571
        %v1580 = vadd.f32 %v1434, %v1572
        %v1581 = vadd.f32 %v1436, %v1573
        %v1582 = vxor.u32 %v1574, 2147483648
        %v1583 = vxor.u32 %v1575, 2147483648
        %v1584 = vxor.u32 %v1576, 2147483648
        %v1585 = vxor.u32 %v1577, 2147483648
        %v1586 = vxor.u32 %v1578, 2147483648
        %v1587 = vxor.u32 %v1579, 2147483648
        %v1588 = vxor.u32 %v1580, 2147483648
        %v1589 = vxor.u32 %v1581, 2147483648
        %v1590 = vmul.f32 %v1582, 1.442695
        %v1591 = vpow.pop %v1590
        %v1592 = vmul.f32 %v1583, 1.442695
        %v1593 = vpow.pop %v1592
        %v1594 = vmul.f32 %v1584, 1.442695
        %v1595 = vpow.pop %v1594
        %v1596 = vmul.f32 %v1585, 1.442695
        %v1597 = vpow.pop %v1596
        %v1598 = vmul.f32 %v1586, 1.442695
        %v1599 = vpow.pop %v1598
        %v1600 = vmul.f32 %v1587, 1.442695
        %v1601 = vpow.pop %v1600
        %v1602 = vmul.f32 %v1588, 1.442695
        %v1603 = vpow.pop %v1602
        %v1604 = vmul.f32 %v1589, 1.442695
        %v1605 = vpow.pop %v1604
        %v1606 = vadd.f32 %v1591, 1.0
        %v1607 = vadd.f32 %v1593, 1.0
        %v1608 = vadd.f32 %v1595, 1.0
        %v1609 = vadd.f32 %v1597, 1.0
        %v1610 = vadd.f32 %v1599, 1.0
        %v1611 = vadd.f32 %v1601, 1.0
        %v1612 = vadd.f32 %v1603, 1.0
        %v1613 = vadd.f32 %v1605, 1.0
        %v1614 = vrcp.pop %v1606
        %v1615 = vmul.f32 1.0, %v1614
        %v1616 = vrcp.pop %v1607
        %v1617 = vmul.f32 1.0, %v1616
        %v1618 = vrcp.pop %v1608
        %v1619 = vmul.f32 1.0, %v1618
        %v1620 = vrcp.pop %v1609
        %v1621 = vmul.f32 1.0, %v1620
        %v1622 = vrcp.pop %v1610
        %v1623 = vmul.f32 1.0, %v1622
        %v1624 = vrcp.pop %v1611
        %v1625 = vmul.f32 1.0, %v1624
        %v1626 = vrcp.pop %v1612
        %v1627 = vmul.f32 1.0, %v1626
        %v1628 = vrcp.pop %v1613
        %v1629 = vmul.f32 1.0, %v1628
        %v1630 = vmul.f32 %v1615, %v1478
        %v1631 = vmul.f32 %v1617, %v1479
        %v1632 = vmul.f32 %v1619, %v1480
        %v1633 = vmul.f32 %v1621, %v1481
        %v1634 = vmul.f32 %v1623, %v1482
        %v1635 = vmul.f32 %v1625, %v1483
        %v1636 = vmul.f32 %v1627, %v1484
        %v1637 = vmul.f32 %v1629, %v1485
        %v1638 = vtanh.pop %v1440
        %v1639 = vtanh.pop %v1442
        %v1640 = vtanh.pop %v1444
        %v1641 = vtanh.pop %v1446
        %v1642 = vtanh.pop %v1450
        %v1643 = vtanh.pop %v1452
        %v1644 = vtanh.pop %v1454
        %v1645 = vtanh.pop %v1456
        %v1646 = vmul.f32 %v1543, %v1638
        %v1647 = vmul.f32 %v1545, %v1639
        %v1648 = vmul.f32 %v1547, %v1640
        %v1649 = vmul.f32 %v1549, %v1641
        %v1650 = vmul.f32 %v1551, %v1642
        %v1651 = vmul.f32 %v1553, %v1643
        %v1652 = vmul.f32 %v1555, %v1644
        %v1653 = vmul.f32 %v1557, %v1645
        %v1654 = vadd.f32 %v1630, %v1646
        %v1655 = vadd.f32 %v1631, %v1647
        %v1656 = vadd.f32 %v1632, %v1648
        %v1657 = vadd.f32 %v1633, %v1649
        %v1658 = vadd.f32 %v1634, %v1650
        %v1659 = vadd.f32 %v1635, %v1651
        %v1660 = vadd.f32 %v1636, %v1652
        %v1661 = vadd.f32 %v1637, %v1653
        %v1662 = vld [vmem:[%s668] sm:$0xff]
        %v1663 = vld [vmem:[%s668 + $0x8] sm:$0xff]
        %v1664 = vld [vmem:[%s668 + $0x10] sm:$0xff]
        %v1665 = vld [vmem:[%s668 + $0x18] sm:$0xff]
        %v1666 = vld [vmem:[%s668 + $0x20] sm:$0xff]
        %v1667 = vld [vmem:[%s668 + $0x28] sm:$0xff]
        %v1668 = vld [vmem:[%s668 + $0x30] sm:$0xff]
        %v1669 = vld [vmem:[%s668 + $0x38] sm:$0xff]
        %v1670 = vmul.f32 %v1654, %v1662
        %v1671 = vmul.f32 %v1655, %v1663
        %v1672 = vmul.f32 %v1656, %v1664
        %v1673 = vmul.f32 %v1657, %v1665
        %v1674 = vmul.f32 %v1658, %v1666
        %v1675 = vmul.f32 %v1659, %v1667
        %v1676 = vmul.f32 %v1660, %v1668
        %v1677 = vmul.f32 %v1661, %v1669
        %v1678 = vadd.f32 %v1460, %v1670
        %v1679 = vadd.f32 %v1462, %v1671
        %v1680 = vadd.f32 %v1464, %v1672
        %v1681 = vadd.f32 %v1466, %v1673
        %v1682 = vadd.f32 %v1470, %v1674
        %v1683 = vadd.f32 %v1472, %v1675
        %v1684 = vadd.f32 %v1474, %v1676
        %v1685 = vadd.f32 %v1476, %v1677
        %v1686 = vxor.u32 %v1678, 2147483648
        %v1687 = vxor.u32 %v1679, 2147483648
        %v1688 = vxor.u32 %v1680, 2147483648
        %v1689 = vxor.u32 %v1681, 2147483648
        %v1690 = vxor.u32 %v1682, 2147483648
        %v1691 = vxor.u32 %v1683, 2147483648
        %v1692 = vxor.u32 %v1684, 2147483648
        %v1693 = vxor.u32 %v1685, 2147483648
        %v1694 = vmul.f32 %v1686, 1.442695
        %v1695 = vpow.pop %v1694
        %v1696 = vmul.f32 %v1687, 1.442695
        %v1697 = vpow.pop %v1696
        %v1698 = vmul.f32 %v1688, 1.442695
        %v1699 = vpow.pop %v1698
        %v1700 = vmul.f32 %v1689, 1.442695
        %v1701 = vpow.pop %v1700
        %v1702 = vmul.f32 %v1690, 1.442695
        %v1703 = vpow.pop %v1702
        %v1704 = vmul.f32 %v1691, 1.442695
        %v1705 = vpow.pop %v1704
        %v1706 = vmul.f32 %v1692, 1.442695
        %v1707 = vpow.pop %v1706
        %v1708 = vmul.f32 %v1693, 1.442695
        %v1709 = vpow.pop %v1708
        %v1710 = vadd.f32 %v1695, 1.0
        %v1711 = vadd.f32 %v1697, 1.0
        %v1712 = vadd.f32 %v1699, 1.0
        %v1713 = vadd.f32 %v1701, 1.0
        %v1714 = vadd.f32 %v1703, 1.0
        %v1715 = vadd.f32 %v1705, 1.0
        %v1716 = vadd.f32 %v1707, 1.0
        %v1717 = vadd.f32 %v1709, 1.0
        %v1718 = vrcp.pop %v1710
        %v1719 = vmul.f32 1.0, %v1718
        %v1720 = vrcp.pop %v1711
        %v1721 = vmul.f32 1.0, %v1720
        %v1722 = vrcp.pop %v1712
        %v1723 = vmul.f32 1.0, %v1722
        %v1724 = vrcp.pop %v1713
        %v1725 = vmul.f32 1.0, %v1724
        %v1726 = vrcp.pop %v1714
        %v1727 = vmul.f32 1.0, %v1726
        %v1728 = vrcp.pop %v1715
        %v1729 = vmul.f32 1.0, %v1728
        %v1730 = vrcp.pop %v1716
        %v1731 = vmul.f32 1.0, %v1730
        %v1732 = vrcp.pop %v1717
        %v1733 = vmul.f32 1.0, %v1732
        %v1734 = vtanh.pop %v1654
        %v1735 = vtanh.pop %v1655
        %v1736 = vtanh.pop %v1656
        %v1737 = vtanh.pop %v1657
        %v1738 = vtanh.pop %v1658
        %v1739 = vtanh.pop %v1659
        %v1740 = vtanh.pop %v1660
        %v1741 = vtanh.pop %v1661
        %v1742 = vmul.f32 %v1719, %v1734
        %v1743 = vmul.f32 %v1721, %v1735
        %v1744 = vmul.f32 %v1723, %v1736
        %v1745 = vmul.f32 %v1725, %v1737
        %v1746 = vmul.f32 %v1727, %v1738
        %v1747 = vmul.f32 %v1729, %v1739
        %v1748 = vmul.f32 %v1731, %v1740
        %v1749 = vmul.f32 %v1733, %v1741
        %1750 = vst [vmem:[%s711] sm:$0xff] %v1742
        %1751 = vst [vmem:[%s711 + $0x8] sm:$0xff] %v1743
        %1752 = vst [vmem:[%s711 + $0x10] sm:$0xff] %v1744
        %1753 = vst [vmem:[%s711 + $0x18] sm:$0xff] %v1745
        %1754 = vst [vmem:[%s711 + $0x20] sm:$0xff] %v1746
        %1755 = vst [vmem:[%s711 + $0x28] sm:$0xff] %v1747
        %1756 = vst [vmem:[%s711 + $0x30] sm:$0xff] %v1748
        %1757 = vst [vmem:[%s711 + $0x38] sm:$0xff] %v1749
        %1758 = vst [vmem:[%s717] sm:$0xff] %v1654
        %1759 = vst [vmem:[%s717 + $0x8] sm:$0xff] %v1655
        %1760 = vst [vmem:[%s717 + $0x10] sm:$0xff] %v1656
        %1761 = vst [vmem:[%s717 + $0x18] sm:$0xff] %v1657
        %1762 = vst [vmem:[%s717 + $0x20] sm:$0xff] %v1658
        %1763 = vst [vmem:[%s717 + $0x28] sm:$0xff] %v1659
        %1764 = vst [vmem:[%s717 + $0x30] sm:$0xff] %v1660
        %1765 = vst [vmem:[%s717 + $0x38] sm:$0xff] %v1661
        %s1766 = sand.u32 %s200, 1
        %s1767 = sand.u32 %s200, 1
        %s1768 = smul.addr %s1767, 64
        %s1769 = scalar_lea.vmem [#allocation7], %s1768
        %s1770 = sand.u32 %s226, 1
        %s1771 = sand.u32 %s226, 1
        %s1772 = smul.addr %s1771, 64
        %s1773 = scalar_lea.vmem [#allocation8], %s1772
        // Predicated region
        $region179: #{conv_lstm_cell.1} parent=157 // pred_check
          %p1774 = pneg %p210
        $region180: #{conv_lstm_cell.1} parent=157 // pred_check_branch
          %1776 = sbr.rel (%p1774) target = $region182
        $region181: #{conv_lstm_cell.1} parent=157 // pred_region
          %s1777 = smul.u32 2, %s20
          %s1778 = smul.addr %s1777, 8
          %s1779 = scalar_lea.vmem %s7, %s1778
          // Predicated region
          $region183: #{conv_lstm_cell.1} parent=181 // pred_check
            _
          $region184: #{conv_lstm_cell.1} parent=181 // pred_check_branch
            %1781 = sbr.rel (0) target = $region186
          $region185: #{conv_lstm_cell.1} parent=181 // pred_region
            // Predicated region
            $region187: #{conv_lstm_cell.1} parent=185 // pred_check
              _
            $region188: #{conv_lstm_cell.1} parent=185 // pred_check_branch
              %1783 = sbr.rel (0) target = $region190
            $region189: #{conv_lstm_cell.1} parent=185 // pred_region
              loop: start=0, step=1, limit=1
              $region191: #{conv_lstm_cell.1} parent=189 // loop_pre_header
                _
              $region192: #{conv_lstm_cell.1} parent=189 // loop_header
                %s1785 = sphi 0, %s1789
                %p1786 = scmp.ge.s32.totalorder %s1785, 1
                %s1790 = sphi %s1769, %s1769
                %s1791 = sphi %s1779, %s1779
              $region193: #{conv_lstm_cell.1} parent=189 // loop_header_branch
                %1788 = sbr.rel (%p1786) target = $region197
              $region194: #{conv_lstm_cell.1} parent=189 // loop_body
                %v1792 = vld [vmem:[%s1790] sm:$0xff]
                %1793 = vst [vmem:[%s1791] sm:$0xff] %v1792
                %v1794 = vld [vmem:[%s1790 + $0x8] sm:$0xff]
                %1795 = vst [vmem:[%s1791 + $0x8] sm:$0xff] %v1794
                %v1796 = vld [vmem:[%s1790 + $0x10] sm:$0xff]
                %1797 = vst [vmem:[%s1791 + $0x20] sm:$0xff] %v1796
                %v1798 = vld [vmem:[%s1790 + $0x18] sm:$0xff]
                %1799 = vst [vmem:[%s1791 + $0x28] sm:$0xff] %v1798
                %v1800 = vld [vmem:[%s1790 + $0x20] sm:$0xff]
                %1801 = vst [vmem:[%s1791 + $0x40] sm:$0xff] %v1800
                %v1802 = vld [vmem:[%s1790 + $0x28] sm:$0xff]
                %1803 = vst [vmem:[%s1791 + $0x48] sm:$0xff] %v1802
                %v1804 = vld [vmem:[%s1790 + $0x30] sm:$0xff]
                %1805 = vst [vmem:[%s1791 + $0x60] sm:$0xff] %v1804
                %v1806 = vld [vmem:[%s1790 + $0x38] sm:$0xff]
                %1807 = vst [vmem:[%s1791 + $0x68] sm:$0xff] %v1806
              $region195: #{conv_lstm_cell.1} parent=189 // loop_footer
                %s1789 = sadd.s32 1, %s1785
              $region196: #{conv_lstm_cell.1} parent=189 // loop_footer_branch
                %1784 = sbr.rel target = $region192
              $region197: #{conv_lstm_cell.1} parent=189 // loop_exit
                _
            $region190: #{conv_lstm_cell.1} parent=185 // pred_fallthru
              _
            // Predicated region
            $region198: #{conv_lstm_cell.1} parent=185 // pred_check
              _
            $region199: #{conv_lstm_cell.1} parent=185 // pred_check_branch
              %1809 = sbr.rel target = $region201
            $region200: #{conv_lstm_cell.1} parent=185 // pred_region
              _
            $region201: #{conv_lstm_cell.1} parent=185 // pred_fallthru
              _
          $region186: #{conv_lstm_cell.1} parent=181 // pred_fallthru
            _
          %1810 = vnop
        $region182: #{conv_lstm_cell.1} parent=157 // pred_fallthru
          _
        // Predicated region
        $region202: #{conv_lstm_cell.1} parent=157 // pred_check
          %p1811 = pneg %p236
        $region203: #{conv_lstm_cell.1} parent=157 // pred_check_branch
          %1813 = sbr.rel (%p1811) target = $region205
        $region204: #{conv_lstm_cell.1} parent=157 // pred_region
          %s1814 = smul.u32 2, %s20
          %s1815 = smul.addr %s1814, 8
          %s1816 = scalar_lea.vmem %s8, %s1815
          // Predicated region
          $region206: #{conv_lstm_cell.1} parent=204 // pred_check
            _
          $region207: #{conv_lstm_cell.1} parent=204 // pred_check_branch
            %1818 = sbr.rel (0) target = $region209
          $region208: #{conv_lstm_cell.1} parent=204 // pred_region
            // Predicated region
            $region210: #{conv_lstm_cell.1} parent=208 // pred_check
              _
            $region211: #{conv_lstm_cell.1} parent=208 // pred_check_branch
              %1820 = sbr.rel (0) target = $region213
            $region212: #{conv_lstm_cell.1} parent=208 // pred_region
              loop: start=0, step=1, limit=1
              $region214: #{conv_lstm_cell.1} parent=212 // loop_pre_header
                _
              $region215: #{conv_lstm_cell.1} parent=212 // loop_header
                %s1822 = sphi 0, %s1826
                %p1823 = scmp.ge.s32.totalorder %s1822, 1
                %s1827 = sphi %s1773, %s1773
                %s1828 = sphi %s1816, %s1816
              $region216: #{conv_lstm_cell.1} parent=212 // loop_header_branch
                %1825 = sbr.rel (%p1823) target = $region220
              $region217: #{conv_lstm_cell.1} parent=212 // loop_body
                %v1829 = vld [vmem:[%s1827] sm:$0xff]
                %1830 = vst [vmem:[%s1828] sm:$0xff] %v1829
                %v1831 = vld [vmem:[%s1827 + $0x8] sm:$0xff]
                %1832 = vst [vmem:[%s1828 + $0x8] sm:$0xff] %v1831
                %v1833 = vld [vmem:[%s1827 + $0x10] sm:$0xff]
                %1834 = vst [vmem:[%s1828 + $0x20] sm:$0xff] %v1833
                %v1835 = vld [vmem:[%s1827 + $0x18] sm:$0xff]
                %1836 = vst [vmem:[%s1828 + $0x28] sm:$0xff] %v1835
                %v1837 = vld [vmem:[%s1827 + $0x20] sm:$0xff]
                %1838 = vst [vmem:[%s1828 + $0x40] sm:$0xff] %v1837
                %v1839 = vld [vmem:[%s1827 + $0x28] sm:$0xff]
                %1840 = vst [vmem:[%s1828 + $0x48] sm:$0xff] %v1839
                %v1841 = vld [vmem:[%s1827 + $0x30] sm:$0xff]
                %1842 = vst [vmem:[%s1828 + $0x60] sm:$0xff] %v1841
                %v1843 = vld [vmem:[%s1827 + $0x38] sm:$0xff]
                %1844 = vst [vmem:[%s1828 + $0x68] sm:$0xff] %v1843
              $region218: #{conv_lstm_cell.1} parent=212 // loop_footer
                %s1826 = sadd.s32 1, %s1822
              $region219: #{conv_lstm_cell.1} parent=212 // loop_footer_branch
                %1821 = sbr.rel target = $region215
              $region220: #{conv_lstm_cell.1} parent=212 // loop_exit
                _
            $region213: #{conv_lstm_cell.1} parent=208 // pred_fallthru
              _
            // Predicated region
            $region221: #{conv_lstm_cell.1} parent=208 // pred_check
              _
            $region222: #{conv_lstm_cell.1} parent=208 // pred_check_branch
              %1846 = sbr.rel target = $region224
            $region223: #{conv_lstm_cell.1} parent=208 // pred_region
              _
            $region224: #{conv_lstm_cell.1} parent=208 // pred_fallthru
              _
          $region209: #{conv_lstm_cell.1} parent=204 // pred_fallthru
            _
          %1847 = vnop
        $region205: #{conv_lstm_cell.1} parent=157 // pred_fallthru
          _
      $region158: #{conv_lstm_cell.1} parent=5 // pred_fallthru
        _
      %p1848 = scmp.le.s32.totalorder 2, %s15
      // Predicated region
      $region225: #{conv_lstm_cell.1} parent=5 // pred_check
        %p1849 = pneg %p1848
      $region226: #{conv_lstm_cell.1} parent=5 // pred_check_branch
        %1851 = sbr.rel (%p1849) target = $region228
      $region227: #{conv_lstm_cell.1} parent=5 // pred_region
        %s1852 = ssub.s32 %s15, 2
        // Predicated region
        $region229: #{conv_lstm_cell.1} parent=227 // pred_check
          %p1853 = pneg %p216
        $region230: #{conv_lstm_cell.1} parent=227 // pred_check_branch
          %1855 = sbr.rel (%p1853) target = $region232
        $region231: #{conv_lstm_cell.1} parent=227 // pred_region
          %s1856 = sand.u32 %s201, 1
          %s1857 = sand.u32 %s201, 1
          %s1858 = smul.addr %s1857, 64
          %s1859 = scalar_lea.vmem [#allocation7], %s1858
        $region232: #{conv_lstm_cell.1} parent=227 // pred_fallthru
          _
        // Predicated region
        $region233: #{conv_lstm_cell.1} parent=227 // pred_check
          %p1860 = pneg %p242
        $region234: #{conv_lstm_cell.1} parent=227 // pred_check_branch
          %1862 = sbr.rel (%p1860) target = $region236
        $region235: #{conv_lstm_cell.1} parent=227 // pred_region
          %s1863 = sand.u32 %s227, 1
          %s1864 = sand.u32 %s227, 1
          %s1865 = smul.addr %s1864, 64
          %s1866 = scalar_lea.vmem [#allocation8], %s1865
        $region236: #{conv_lstm_cell.1} parent=227 // pred_fallthru
          _
      $region228: #{conv_lstm_cell.1} parent=5 // pred_fallthru
        _
    $region6: #{conv_lstm_cell.1} parent=1 // loop_footer
      %s19 = sadd.s32 1, %s15
    $region7: #{conv_lstm_cell.1} parent=1 // loop_footer_branch
      %14 = sbr.rel target = $region3
    $region8: #{conv_lstm_cell.1} parent=1 // loop_exit
      _

</llo_original>
